<compile_context>
chip_gen: v7x
topology: tpu7x:2x2x1
jax: 0.10.0
libtpu: 0.0.40
codegen_flags: <defaults>
</compile_context>

<pallas_src>
import functools

import jax
import jax.numpy as jnp
from jax import lax
from jax.experimental import pallas as pl
from jax.experimental.pallas import tpu as pltpu


def _skip_connection_kernel(xs_ref, w_ref, b_ref, o_ref):
    """Fused (body + skip) 3x3 conv for one H-strip of one batch element.

    xs_ref: (1, TH+2, W+2, Cin)  zero-padded NHWC input strip (2-row halo)
    w_ref : (9*Cin, Cp)          im2col weights, skip 1x1 folded into centre tap
    b_ref : (1, Cp)              fused body+skip bias
    o_ref : (1, TH, W, Cp)       output strip (NHWC, Cout padded to Cp lanes)
    """
    _, _, _, c_in = xs_ref.shape
    _, th, w, _ = o_ref.shape

    # im2col: 9 shifted slabs -> one (TH*W, 9*Cin) patch, single MXU matmul.
    taps = [
        xs_ref[0, kh:kh + th, kw:kw + w, :].reshape(th * w, c_in)
        for kh in range(3) for kw in range(3)
    ]
    patch = jnp.concatenate(taps, axis=-1)                       # (TH*W, 9*Cin)

    acc = jnp.dot(patch, w_ref[...], preferred_element_type=jnp.float32)
    acc = acc + b_ref[...].astype(jnp.float32)                   # single bias pass

    o_ref[...] = acc.reshape(o_ref.shape).astype(o_ref.dtype)


def _choose_block_h(h, w, c_in, c_out_p, itemsize, budget=4 * 1024 * 1024):
    """Largest H-strip (divisor of h) whose in+out blocks fit the VMEM budget."""
    def block_bytes(th):
        return ((th + 2) * (w + 2) * c_in + th * w * c_out_p) * itemsize
    for th in sorted((d for d in range(1, h + 1) if h % d == 0), reverse=True):
        if block_bytes(th) <= budget:
            return th
    return 1


@functools.partial(jax.jit, static_argnames=("block_h",))
def skip_connection_forward(x_nchw, w_body, b_body, w_skip=None, b_skip=None,
                            *, block_h=None):
    """SkipConnection.forward.  x_nchw: (N, Cin, H, W) -> (N, Cout, H, W).

    w_body: (Cout, Cin, 3, 3), b_body: (Cout,)
    w_skip: (Cout, Cin, 1, 1), b_skip: (Cout,), or None/None when
            in_channels == out_channels (identity skip).
    """
    n, c_in, h, w = x_nchw.shape
    c_out = w_body.shape[0]

    # ---- Fold the skip path into the body conv (free, done once on weights) --
    w_fold = w_body.astype(jnp.float32)
    if w_skip is None:
        if c_in != c_out:
            raise ValueError("identity skip requires in_channels == out_channels")
        skip_mat = jnp.eye(c_in, dtype=jnp.float32)          # identity as 1x1
        bias = b_body.astype(jnp.float32)
    else:
        skip_mat = w_skip[:, :, 0, 0].astype(jnp.float32)    # (Cout, Cin)
        bias = b_body.astype(jnp.float32) + b_skip.astype(jnp.float32)
    w_fold = w_fold.at[:, :, 1, 1].add(skip_mat)             # centre tap += skip

    # im2col weight layout: (Cout, Cin, 3, 3) -> (kh, kw, Cin, Cout) -> (9*Cin, Cout).
    # K index = (kh*3 + kw)*Cin + ci, matching the in-kernel tap concat order.
    w_mat = jnp.transpose(w_fold, (2, 3, 1, 0)).reshape(9 * c_in, c_out)

    # Pad Cout to a lane-dense multiple of 128 (unmasked output stores).
    c_out_p = ((c_out + 127) // 128) * 128
    w_mat = jnp.pad(w_mat, ((0, 0), (0, c_out_p - c_out)))
    bias_row = jnp.pad(bias, (0, c_out_p - c_out)).reshape(1, c_out_p)

    # ---- Spatial strip tiling over H (bounded VMEM, deep pipeline) -----------
    if block_h is None:
        th = _choose_block_h(h, w, c_in, c_out_p, x_nchw.dtype.itemsize)
    else:
        th = block_h if (0 < block_h <= h and h % block_h == 0) else h
    s = h // th

    # NCHW -> NHWC, zero-pad, pack overlapping halo strips.  These fuse into one
    # XLA copy pass (the previous version already paid a transpose+pad pass).
    x_pad = jnp.pad(jnp.transpose(x_nchw, (0, 2, 3, 1)),
                    ((0, 0), (1, 1), (1, 1), (0, 0)))
    if s == 1:
        x_strips = x_pad                                      # (N, H+2, W+2, Cin)
    else:
        x_strips = jnp.concatenate(
            [x_pad[:, i * th: i * th + th + 2] for i in range(s)], axis=1)
        # (N, S*(TH+2), W+2, Cin): strip i occupies rows [i*(TH+2), (i+1)*(TH+2))

    out_nhwc = pl.pallas_call(
        _skip_connection_kernel,
        out_shape=jax.ShapeDtypeStruct((n, h, w, c_out_p), x_nchw.dtype),
        grid_spec=pltpu.PrefetchScalarGridSpec(
            num_scalar_prefetch=0,
            grid=(n, s),
            in_specs=[
                pl.BlockSpec((1, th + 2, w + 2, c_in),
                             lambda ni, si: (ni, si, 0, 0)),
                pl.BlockSpec((9 * c_in, c_out_p), lambda ni, si: (0, 0)),
                pl.BlockSpec((1, c_out_p), lambda ni, si: (0, 0)),
            ],
            out_specs=pl.BlockSpec((1, th, w, c_out_p),
                                   lambda ni, si: (ni, si, 0, 0)),
        ),
        compiler_params=pltpu.CompilerParams(
            dimension_semantics=("parallel", "parallel"),
            vmem_limit_bytes=32 * 1024 * 1024,
        ),
    )(x_strips, w_mat, bias_row)

    # Strip the Cout padding and go back to NCHW (one fused XLA op).
    return jnp.transpose(out_nhwc[..., :c_out], (0, 3, 1, 2))


def make_params(key, in_channels, out_channels, dtype=jnp.float32):
    """Deterministic synthetic parameters matching the PyTorch module shapes."""
    k1, k2, k3, k4 = jax.random.split(key, 4)
    w_body = jax.random.uniform(
        k1, (out_channels, in_channels, 3, 3), dtype,
        minval=-1.0, maxval=1.0) / jnp.sqrt(float(in_channels * 9))
    b_body = jax.random.uniform(
        k2, (out_channels,), dtype, minval=-0.1, maxval=0.1)
    if in_channels == out_channels:
        return w_body, b_body, None, None        # skip = identity
    w_skip = jax.random.uniform(
        k3, (out_channels, in_channels, 1, 1), dtype,
        minval=-1.0, maxval=1.0) / jnp.sqrt(float(in_channels))
    b_skip = jax.random.uniform(
        k4, (out_channels,), dtype, minval=-0.1, maxval=0.1)
    return w_body, b_body, w_skip, b_skip


def _reference(x_nchw, w_body, b_body, w_skip, b_skip):
    """Pure-JAX reference (lax convs) for correctness checking."""
    dn = ("NCHW", "OIHW", "NCHW")
    out = lax.conv_general_dilated(x_nchw, w_body, (1, 1), "SAME",
                                   dimension_numbers=dn)
    out = out + b_body[None, :, None, None]
    if w_skip is None:
        out = out + x_nchw                      # identity skip
    else:
        skip = lax.conv_general_dilated(x_nchw, w_skip, (1, 1), "SAME",
                                        dimension_numbers=dn)
        out = out + skip + b_skip[None, :, None, None]
    return out


if __name__ == "__main__":
    key = jax.random.PRNGKey(0)
    kx, kp1, kp2 = jax.random.split(key, 3)

    N, Cin, H, W = 2, 4, 16, 16
    x = jax.random.normal(kx, (N, Cin, H, W), jnp.float32)

    # Case 1: in_channels != out_channels -> skip is a 1x1 conv (fused).
    Cout = 8
    p1 = make_params(kp1, Cin, Cout)
    out1 = skip_connection_forward(x, *p1)
    jax.block_until_ready(out1)
    ref1 = _reference(x, *p1)
    assert out1.shape == (N, Cout, H, W)
    assert jnp.allclose(out1, ref1, atol=2e-4, rtol=2e-4)

    # Same case with explicit H-strip tiling (exercises the (N, S) grid path).
    out1s = skip_connection_forward(x, *p1, block_h=8)
    jax.block_until_ready(out1s)
    assert jnp.allclose(out1s, ref1, atol=2e-4, rtol=2e-4)

    # Case 2: in_channels == out_channels -> skip is identity (folded as +I).
    p2 = make_params(kp2, Cin, Cin)
    out2 = skip_connection_forward(x, *p2)
    jax.block_until_ready(out2)
    ref2 = _reference(x, *p2)
    assert out2.shape == (N, Cin, H, W)
    assert jnp.allclose(out2, ref2, atol=2e-4, rtol=2e-4)

    print("KERNEL_OK")
</pallas_src>

<mosaic_0001>
module attributes {stable_mosaic.version = 11 : i64} {
  func.func @_skip_connection_kernel(%arg0: i32, %arg1: i32, %arg2: memref<1x18x18x4xf32, #tpu.memory_space<vmem>>, %arg3: memref<36x128xf32, #tpu.memory_space<vmem>>, %arg4: memref<1x128xf32, #tpu.memory_space<vmem>>, %arg5: memref<1x16x16x128xf32, #tpu.memory_space<vmem>>) attributes {dimension_semantics = [#tpu.dimension_semantics<parallel>, #tpu.dimension_semantics<parallel>], iteration_bounds = array<i64: 2, 1>, scalar_prefetch = 0 : i64, scratch_operands = 0 : i64, tpu.core_type = #tpu.core_type<tc>, window_params = [{transform_indices = @transform_0, window_bounds = array<i64: 1, 18, 18, 4>}, {pipeline_mode = #tpu.pipeline_mode<synchronous>, transform_indices = @transform_1, window_bounds = array<i64: 36, 128>}, {pipeline_mode = #tpu.pipeline_mode<synchronous>, transform_indices = @transform_2, window_bounds = array<i64: 1, 128>}, {transform_indices = @transform_3, window_bounds = array<i64: 1, 16, 16, 128>}]} {
    %c0 = arith.constant 0 : index
    %c0_0 = arith.constant 0 : index
    %c0_1 = arith.constant 0 : index
    %c0_2 = arith.constant 0 : index
    %0 = vector.load %arg2[%c0, %c0_0, %c0_1, %c0_2] : memref<1x18x18x4xf32, #tpu.memory_space<vmem>>, vector<1x16x16x4xf32>
    %1 = vector.shape_cast %0 : vector<1x16x16x4xf32> to vector<16x16x4xf32>
    %2 = vector.shape_cast %1 : vector<16x16x4xf32> to vector<256x4xf32>
    %c0_3 = arith.constant 0 : index
    %c0_4 = arith.constant 0 : index
    %c1 = arith.constant 1 : index
    %c0_5 = arith.constant 0 : index
    %3 = vector.load %arg2[%c0_3, %c0_4, %c1, %c0_5] : memref<1x18x18x4xf32, #tpu.memory_space<vmem>>, vector<1x16x16x4xf32>
    %4 = vector.shape_cast %3 : vector<1x16x16x4xf32> to vector<16x16x4xf32>
    %5 = vector.shape_cast %4 : vector<16x16x4xf32> to vector<256x4xf32>
    %c0_6 = arith.constant 0 : index
    %c0_7 = arith.constant 0 : index
    %c2 = arith.constant 2 : index
    %c0_8 = arith.constant 0 : index
    %6 = vector.load %arg2[%c0_6, %c0_7, %c2, %c0_8] : memref<1x18x18x4xf32, #tpu.memory_space<vmem>>, vector<1x16x16x4xf32>
    %7 = vector.shape_cast %6 : vector<1x16x16x4xf32> to vector<16x16x4xf32>
    %8 = vector.shape_cast %7 : vector<16x16x4xf32> to vector<256x4xf32>
    %c0_9 = arith.constant 0 : index
    %c1_10 = arith.constant 1 : index
    %c0_11 = arith.constant 0 : index
    %c0_12 = arith.constant 0 : index
    %9 = vector.load %arg2[%c0_9, %c1_10, %c0_11, %c0_12] : memref<1x18x18x4xf32, #tpu.memory_space<vmem>>, vector<1x16x16x4xf32>
    %10 = vector.shape_cast %9 : vector<1x16x16x4xf32> to vector<16x16x4xf32>
    %11 = vector.shape_cast %10 : vector<16x16x4xf32> to vector<256x4xf32>
    %c0_13 = arith.constant 0 : index
    %c1_14 = arith.constant 1 : index
    %c1_15 = arith.constant 1 : index
    %c0_16 = arith.constant 0 : index
    %12 = vector.load %arg2[%c0_13, %c1_14, %c1_15, %c0_16] : memref<1x18x18x4xf32, #tpu.memory_space<vmem>>, vector<1x16x16x4xf32>
    %13 = vector.shape_cast %12 : vector<1x16x16x4xf32> to vector<16x16x4xf32>
    %14 = vector.shape_cast %13 : vector<16x16x4xf32> to vector<256x4xf32>
    %c0_17 = arith.constant 0 : index
    %c1_18 = arith.constant 1 : index
    %c2_19 = arith.constant 2 : index
    %c0_20 = arith.constant 0 : index
    %15 = vector.load %arg2[%c0_17, %c1_18, %c2_19, %c0_20] : memref<1x18x18x4xf32, #tpu.memory_space<vmem>>, vector<1x16x16x4xf32>
    %16 = vector.shape_cast %15 : vector<1x16x16x4xf32> to vector<16x16x4xf32>
    %17 = vector.shape_cast %16 : vector<16x16x4xf32> to vector<256x4xf32>
    %c0_21 = arith.constant 0 : index
    %c2_22 = arith.constant 2 : index
    %c0_23 = arith.constant 0 : index
    %c0_24 = arith.constant 0 : index
    %18 = vector.load %arg2[%c0_21, %c2_22, %c0_23, %c0_24] : memref<1x18x18x4xf32, #tpu.memory_space<vmem>>, vector<1x16x16x4xf32>
    %19 = vector.shape_cast %18 : vector<1x16x16x4xf32> to vector<16x16x4xf32>
    %20 = vector.shape_cast %19 : vector<16x16x4xf32> to vector<256x4xf32>
    %c0_25 = arith.constant 0 : index
    %c2_26 = arith.constant 2 : index
    %c1_27 = arith.constant 1 : index
    %c0_28 = arith.constant 0 : index
    %21 = vector.load %arg2[%c0_25, %c2_26, %c1_27, %c0_28] : memref<1x18x18x4xf32, #tpu.memory_space<vmem>>, vector<1x16x16x4xf32>
    %22 = vector.shape_cast %21 : vector<1x16x16x4xf32> to vector<16x16x4xf32>
    %23 = vector.shape_cast %22 : vector<16x16x4xf32> to vector<256x4xf32>
    %c0_29 = arith.constant 0 : index
    %c2_30 = arith.constant 2 : index
    %c2_31 = arith.constant 2 : index
    %c0_32 = arith.constant 0 : index
    %24 = vector.load %arg2[%c0_29, %c2_30, %c2_31, %c0_32] : memref<1x18x18x4xf32, #tpu.memory_space<vmem>>, vector<1x16x16x4xf32>
    %25 = vector.shape_cast %24 : vector<1x16x16x4xf32> to vector<16x16x4xf32>
    %26 = vector.shape_cast %25 : vector<16x16x4xf32> to vector<256x4xf32>
    %27 = tpu.concatenate %2, %5, %8, %11, %14, %17, %20, %23, %26 in 1 : vector<256x4xf32>, vector<256x4xf32>, vector<256x4xf32>, vector<256x4xf32>, vector<256x4xf32>, vector<256x4xf32>, vector<256x4xf32>, vector<256x4xf32>, vector<256x4xf32> -> vector<256x36xf32>
    %c0_33 = arith.constant 0 : index
    %c0_34 = arith.constant 0 : index
    %28 = vector.load %arg3[%c0_33, %c0_34] : memref<36x128xf32, #tpu.memory_space<vmem>>, vector<36x128xf32>
    %cst = arith.constant dense<0.000000e+00> : vector<256x128xf32>
    %29 = tpu.matmul %27, %28, %cst {dimension_numbers = #tpu.dot_dimension_numbers<[1], [0], [0], [1], [0, 0, 1, 1], [], []>} : vector<256x36xf32>, vector<36x128xf32>, vector<256x128xf32> -> vector<256x128xf32>
    %c0_35 = arith.constant 0 : index
    %c0_36 = arith.constant 0 : index
    %30 = vector.load %arg4[%c0_35, %c0_36] : memref<1x128xf32, #tpu.memory_space<vmem>>, vector<1x128xf32>
    %31 = vector.broadcast %30 : vector<1x128xf32> to vector<256x128xf32>
    %32 = arith.addf %29, %31 : vector<256x128xf32>
    %33 = vector.shape_cast %32 : vector<256x128xf32> to vector<1x16x16x128xf32>
    %c0_37 = arith.constant 0 : index
    %c0_38 = arith.constant 0 : index
    %c0_39 = arith.constant 0 : index
    %c0_40 = arith.constant 0 : index
    %34 = vector.load %arg5[%c0_37, %c0_38, %c0_39, %c0_40] : memref<1x16x16x128xf32, #tpu.memory_space<vmem>>, vector<1x16x16x128xf32>
    tpu.vector_store %arg5[%c0_37, %c0_38, %c0_39, %c0_40], %33 {strides = array<i32>} : memref<1x16x16x128xf32, #tpu.memory_space<vmem>>, vector<1x16x16x128xf32>,
    return
  }
  func.func @transform_0(%arg0: i32, %arg1: i32) -> (i32, i32, i32, i32) {
    %c0_i32 = arith.constant 0 : i32
    %c0_i32_0 = arith.constant 0 : i32
    %c0_i32_1 = arith.constant 0 : i32
    return %arg0, %arg1, %c0_i32, %c0_i32_0 : i32, i32, i32, i32
  }
  func.func @transform_1(%arg0: i32, %arg1: i32) -> (i32, i32) {
    %c0_i32 = arith.constant 0 : i32
    %c0_i32_0 = arith.constant 0 : i32
    %c0_i32_1 = arith.constant 0 : i32
    return %c0_i32, %c0_i32_0 : i32, i32
  }
  func.func @transform_2(%arg0: i32, %arg1: i32) -> (i32, i32) {
    %c0_i32 = arith.constant 0 : i32
    %c0_i32_0 = arith.constant 0 : i32
    %c0_i32_1 = arith.constant 0 : i32
    return %c0_i32, %c0_i32_0 : i32, i32
  }
  func.func @transform_3(%arg0: i32, %arg1: i32) -> (i32, i32, i32, i32) {
    %c0_i32 = arith.constant 0 : i32
    %c0_i32_0 = arith.constant 0 : i32
    %c0_i32_1 = arith.constant 0 : i32
    return %arg0, %arg1, %c0_i32, %c0_i32_0 : i32, i32, i32, i32
  }
}

</mosaic_0001>

<llo_original>
// kernel: skip_connection_forward.1
$region0: #{skip_connection_forward.1}
  #allocation0 [shape = 'u32[]', space=smem, size = 0x4, offset = 0x4, fixed_abs, tag = 'smem constant byte address 0x4 - core index']
  #allocation1 [shape = 'u32[144,128]{1,0:T(1,128)}', space=vmem, size = 0x12000, scoped, tag = 'internal scratch']
  %s0 = inlined_call_operand.vmem [shape: f32[2,18,18,4], index: 0, kind: input, shape index: {}]
  %s1 = inlined_call_operand.vmem [shape: f32[36,128], index: 1, kind: input, shape index: {}]
  %s2 = inlined_call_operand.vmem [shape: f32[1,128], index: 2, kind: input, shape index: {}]
  %s3 = inlined_call_operand.vmem [shape: f32[2,16,16,128], index: 3, kind: output, shape index: {}]
  %s4 = sld [smem:[#allocation0]]
  $region45: #{skip_connection_forward.1} parent=0
    _
  %s6 = ssub.s32 1, %s4
  %s7 = scalar_select 0, %s6, %s4
  loop: start=0, step=1, limit=4
  $region2: #{skip_connection_forward.1} parent=0 // loop_pre_header
    _
  $region3: #{skip_connection_forward.1} parent=0 // loop_header
    %s9 = sphi 0, %s13
    %p10 = scmp.ge.s32.totalorder %s9, 4
    %s16 = sphi 0, %s28
    %s17 = sphi 0, %s24
    %s18 = sphi 0, %s16
    %s19 = sphi 0, %s17
    %s20 = sphi 0, %s18
    %s21 = sphi 0, %s19
    %s33 = sphi 0, %s35
    %s36 = sphi 0, %s33
    %s37 = sphi 0, %s36
    %s53 = sphi 0, %s37
    %s57 = sphi 0, %s57
    %s59 = sphi 0, %s57
    %s60 = sphi 0, %s59
    %s74 = sphi 0, %s60
    %s78 = sphi 0, %s78
    %s80 = sphi 0, %s78
    %s81 = sphi 0, %s80
    %s95 = sphi 0, %s81
    %s103 = sphi 0, %s105
    %s106 = sphi 0, %s103
    %s107 = sphi 0, %s106
    %s123 = sphi 0, %s107
  $region4: #{skip_connection_forward.1} parent=0 // loop_header_branch
    %12 = sbr.rel (%p10) target = $region8
  $region5: #{skip_connection_forward.1} parent=0 // loop_body
    %s14 = ssub.s32 %s9, 1
    %s15 = ssub.s32 %s9, 2
    %s22 = sadd.s32 1, %s17
    %p23 = scmp.ge.s32.totalorder %s22, 1
    %s24 = scalar_select %p23, 0, %s22
    %s25 = sadd.s32 1, %s16
    %s26 = scalar_select %p23, %s25, %s16
    %p27 = scmp.ge.s32.totalorder %s26, 2
    %s28 = scalar_select %p27, 0, %s26
    %s29 = ssub.s32 %s16, %s28
    %s30 = ssub.s32 %s17, %s24
    %s31 = sor.u32 %s29, %s30
    %p32 = scmp.eq.s32.totalorder %s31, 0
    %s34 = sadd.s32 %s33, 1
    %s35 = scalar_select %p32, %s33, %s34
    %p38 = pneg %p32
    %p39 = scmp.eq.s32.totalorder %s9, 1
    %p40 = por %p38, %p39
    %p41 = scmp.ne.s32.totalorder %s33, %s36
    %p42 = scmp.eq.s32.totalorder %s9, 0
    %p43 = por %p41, %p42
    %p44 = scmp.ne.s32.totalorder %s33, %s36
    %p45 = scmp.eq.s32.totalorder %s14, 1
    %p46 = por %p44, %p45
    %p47 = scmp.ne.s32.totalorder %s36, %s37
    %p48 = scmp.eq.s32.totalorder %s14, 0
    %p49 = por %p47, %p48
    %p50 = scmp.ne.s32.totalorder %s36, %s37
    %p51 = scmp.eq.s32.totalorder %s15, 1
    %p52 = por %p50, %p51
    %p54 = scmp.ne.s32.totalorder %s37, %s53
    %p55 = scmp.eq.s32.totalorder %s15, 0
    %p56 = por %p54, %p55
    %s58 = sadd.s32 %s57, 1
    %p61 = scmp.eq.s32.totalorder %s9, 1
    %p62 = scmp.ne.s32.totalorder %s57, %s59
    %p63 = scmp.eq.s32.totalorder %s9, 0
    %p64 = por %p62, %p63
    %p65 = scmp.ne.s32.totalorder %s57, %s59
    %p66 = scmp.eq.s32.totalorder %s14, 1
    %p67 = por %p65, %p66
    %p68 = scmp.ne.s32.totalorder %s59, %s60
    %p69 = scmp.eq.s32.totalorder %s14, 0
    %p70 = por %p68, %p69
    %p71 = scmp.ne.s32.totalorder %s59, %s60
    %p72 = scmp.eq.s32.totalorder %s15, 1
    %p73 = por %p71, %p72
    %p75 = scmp.ne.s32.totalorder %s60, %s74
    %p76 = scmp.eq.s32.totalorder %s15, 0
    %p77 = por %p75, %p76
    %s79 = sadd.s32 %s78, 1
    %p82 = scmp.eq.s32.totalorder %s9, 1
    %p83 = scmp.ne.s32.totalorder %s78, %s80
    %p84 = scmp.eq.s32.totalorder %s9, 0
    %p85 = por %p83, %p84
    %p86 = scmp.ne.s32.totalorder %s78, %s80
    %p87 = scmp.eq.s32.totalorder %s14, 1
    %p88 = por %p86, %p87
    %p89 = scmp.ne.s32.totalorder %s80, %s81
    %p90 = scmp.eq.s32.totalorder %s14, 0
    %p91 = por %p89, %p90
    %p92 = scmp.ne.s32.totalorder %s80, %s81
    %p93 = scmp.eq.s32.totalorder %s15, 1
    %p94 = por %p92, %p93
    %p96 = scmp.ne.s32.totalorder %s81, %s95
    %p97 = scmp.eq.s32.totalorder %s15, 0
    %p98 = por %p96, %p97
    %s99 = ssub.s32 %s16, %s28
    %s100 = ssub.s32 %s17, %s24
    %s101 = sor.u32 %s99, %s100
    %p102 = scmp.eq.s32.totalorder %s101, 0
    %s104 = sadd.s32 %s103, 1
    %s105 = scalar_select %p102, %s103, %s104
    %p108 = pneg %p102
    %p109 = scmp.eq.s32.totalorder %s9, 1
    %p110 = por %p108, %p109
    %p111 = scmp.ne.s32.totalorder %s103, %s106
    %p112 = scmp.eq.s32.totalorder %s9, 0
    %p113 = por %p111, %p112
    %p114 = scmp.ne.s32.totalorder %s103, %s106
    %p115 = scmp.eq.s32.totalorder %s14, 1
    %p116 = por %p114, %p115
    %p117 = scmp.ne.s32.totalorder %s106, %s107
    %p118 = scmp.eq.s32.totalorder %s14, 0
    %p119 = por %p117, %p118
    %p120 = scmp.ne.s32.totalorder %s106, %s107
    %p121 = scmp.eq.s32.totalorder %s15, 1
    %p122 = por %p120, %p121
    %p124 = scmp.ne.s32.totalorder %s107, %s123
    %p125 = scmp.eq.s32.totalorder %s15, 0
    %p126 = por %p124, %p125
    %p127 = scmp.le.s32.totalorder 1, %s9
    %p128 = scmp.lt.s32.totalorder %s9, 3
    %p129 = pnand %p127, %p128
    %p130 = pneg %p129
    // Predicated region
    $region9: #{skip_connection_forward.1} parent=5 // pred_check
      _
    $region10: #{skip_connection_forward.1} parent=5 // pred_check_branch
      %132 = sbr.rel (%p129) target = $region12
    $region11: #{skip_connection_forward.1} parent=5 // pred_region
      %s133 = ssub.s32 %s9, 1
      // Predicated region
      $region13: #{skip_connection_forward.1} parent=11 // pred_check
        %p134 = pneg %p70
      $region14: #{skip_connection_forward.1} parent=11 // pred_check_branch
        %136 = sbr.rel (%p134) target = $region16
      $region15: #{skip_connection_forward.1} parent=11 // pred_region
        _
      $region16: #{skip_connection_forward.1} parent=11 // pred_fallthru
        _
      // Predicated region
      $region17: #{skip_connection_forward.1} parent=11 // pred_check
        %p137 = pneg %p91
      $region18: #{skip_connection_forward.1} parent=11 // pred_check_branch
        %139 = sbr.rel (%p137) target = $region20
      $region19: #{skip_connection_forward.1} parent=11 // pred_region
        _
      $region20: #{skip_connection_forward.1} parent=11 // pred_fallthru
        _
    $region12: #{skip_connection_forward.1} parent=5 // pred_fallthru
      _
    %p140 = scmp.lt.s32.totalorder %s9, 2
    // Predicated region
    $region21: #{skip_connection_forward.1} parent=5 // pred_check
      %p141 = pneg %p140
    $region22: #{skip_connection_forward.1} parent=5 // pred_check_branch
      %143 = sbr.rel (%p141) target = $region24
    $region23: #{skip_connection_forward.1} parent=5 // pred_region
      // Predicated region
      $region25: #{skip_connection_forward.1} parent=23 // pred_check
        %p144 = pneg %p43
      $region26: #{skip_connection_forward.1} parent=23 // pred_check_branch
        %146 = sbr.rel (%p144) target = $region28
      $region27: #{skip_connection_forward.1} parent=23 // pred_region
        %s147 = smul.u32 18, %s17
        %p148 = scmp.lt.s32.totalorder %s16, 1
        %s149 = scalar_select %p148, %s16, 1
        %p150 = scmp.lt.s32.totalorder %s147, 17
        %s151 = scalar_select %p150, %s147, 17
        %s152 = smul.addr %s151, 3
        %s153 = smul.addr %s149, 54
        %s154 = sadd.s32 %s152, %s153
        %s155 = smul.addr %s154, 8
        %s156 = scalar_lea.vmem %s0, %s155
        %s157 = smul.u32 18, %s17
      $region28: #{skip_connection_forward.1} parent=23 // pred_fallthru
        _
    $region24: #{skip_connection_forward.1} parent=5 // pred_fallthru
      _
    %p158 = scmp.le.s32.totalorder 1, %s9
    %p159 = scmp.lt.s32.totalorder %s9, 3
    %p160 = pnand %p158, %p159
    %p161 = pneg %p160
    // Predicated region
    $region29: #{skip_connection_forward.1} parent=5 // pred_check
      _
    $region30: #{skip_connection_forward.1} parent=5 // pred_check_branch
      %163 = sbr.rel (%p160) target = $region32
    $region31: #{skip_connection_forward.1} parent=5 // pred_region
      %s164 = ssub.s32 %s9, 1
      %s165 = smul.u32 18, %s19
      %p166 = scmp.lt.s32.totalorder %s18, 1
      %s167 = scalar_select %p166, %s18, 1
      %p168 = scmp.lt.s32.totalorder %s165, 17
      %s169 = scalar_select %p168, %s165, 17
      %s170 = smul.addr %s169, 3
      %s171 = smul.addr %s167, 54
      %s172 = sadd.s32 %s170, %s171
      %s173 = smul.addr %s172, 8
      %s174 = scalar_lea.vmem %s0, %s173
      %p175 = pneg %p49
      %p176 = pneg %p46
      %p177 = pneg %p70
      %p178 = pneg %p67
      %p179 = pneg %p91
      %p180 = pneg %p88
      %p181 = pneg %p119
      %p182 = pneg %p116
      %s183 = smul.u32 16, %s19
      %p184 = scmp.lt.s32.totalorder %s18, 1
      %s185 = scalar_select %p184, %s18, 1
      %p186 = scmp.lt.s32.totalorder %s183, 15
      %s187 = scalar_select %p186, %s183, 15
      %s188 = smul.addr %s187, 2
      %s189 = smul.addr %s185, 32
      %s190 = sadd.s32 %s188, %s189
      %s191 = smul.addr %s190, 8
      %s192 = scalar_lea.vmem %s3, %s191
      %s193 = smul.u32 18, %s19
      %p194 = scmp.lt.s32.totalorder %s18, 1
      %s195 = scalar_select %p194, %s18, 1
      %p196 = scmp.lt.s32.totalorder %s193, 17
      %s197 = scalar_select %p196, %s193, 17
      %s198 = smul.addr %s197, 3
      %s199 = smul.addr %s195, 54
      %s200 = sadd.s32 %s198, %s199
      %s201 = smul.addr %s200, 8
      %s202 = scalar_lea.vmem %s0, %s201
      %s203 = smul.u32 18, %s19
      %s204 = smul.u32 16, %s19
      %p205 = scmp.lt.s32.totalorder %s18, 1
      %s206 = scalar_select %p205, %s18, 1
      %p207 = scmp.lt.s32.totalorder %s204, 15
      %s208 = scalar_select %p207, %s204, 15
      %s209 = smul.addr %s208, 2
      %s210 = smul.addr %s206, 32
      %s211 = sadd.s32 %s209, %s210
      %s212 = smul.addr %s211, 8
      %s213 = scalar_lea.vmem %s3, %s212
      %s214 = smul.u32 16, %s19
      %v215 = vld [vmem:[%s202] sm:$0xff]
      %v216 = vld [vmem:[%s202 + $0x8] sm:$0xff]
      %v217 = vld [vmem:[%s202 + $0x18] sm:$0xff]
      %v218 = vld [vmem:[%s202 + $0x20] sm:$0xff]
      %v219 = vld [vmem:[%s202 + $0x30] sm:$0xff]
      %v220 = vld [vmem:[%s202 + $0x38] sm:$0xff]
      %v221 = vld [vmem:[%s202 + $0x48] sm:$0xff]
      %v222 = vld [vmem:[%s202 + $0x50] sm:$0xff]
      %v223 = vld [vmem:[%s202 + $0x60] sm:$0xff]
      %v224 = vld [vmem:[%s202 + $0x68] sm:$0xff]
      %v225 = vld [vmem:[%s202 + $0x78] sm:$0xff]
      %v226 = vld [vmem:[%s202 + $0x80] sm:$0xff]
      %v227 = vld [vmem:[%s202 + $0x90] sm:$0xff]
      %v228 = vld [vmem:[%s202 + $0x98] sm:$0xff]
      %v229 = vld [vmem:[%s202 + $0xa8] sm:$0xff]
      %v230 = vld [vmem:[%s202 + $0xb0] sm:$0xff]
      %v231 = vld [vmem:[%s202 + $0xc0] sm:$0xff]
      %v232 = vld [vmem:[%s202 + $0xc8] sm:$0xff]
      %v233 = vld [vmem:[%s202 + $0xd8] sm:$0xff]
      %v234 = vld [vmem:[%s202 + $0xe0] sm:$0xff]
      %v235 = vld [vmem:[%s202 + $0xf0] sm:$0xff]
      %v236 = vld [vmem:[%s202 + $0xf8] sm:$0xff]
      %v237 = vld [vmem:[%s202 + $0x108] sm:$0xff]
      %v238 = vld [vmem:[%s202 + $0x110] sm:$0xff]
      %v239 = vld [vmem:[%s202 + $0x120] sm:$0xff]
      %v240 = vld [vmem:[%s202 + $0x128] sm:$0xff]
      %v241 = vld [vmem:[%s202 + $0x138] sm:$0xff]
      %v242 = vld [vmem:[%s202 + $0x140] sm:$0xff]
      %v243 = vld [vmem:[%s202 + $0x150] sm:$0xff]
      %v244 = vld [vmem:[%s202 + $0x158] sm:$0xff]
      %v245 = vld [vmem:[%s202 + $0x168] sm:$0xff]
      %v246 = vld [vmem:[%s202 + $0x170] sm:$0xff]
      %v247 = vld [vmem:[%s202 + $0x1] sm:$0xff]
      %v248 = vld [vmem:[%s202 + $0x9] sm:$0xff]
      %v249 = vld [vmem:[%s202 + $0x19] sm:$0xff]
      %v250 = vld [vmem:[%s202 + $0x21] sm:$0xff]
      %v251 = vld [vmem:[%s202 + $0x31] sm:$0xff]
      %v252 = vld [vmem:[%s202 + $0x39] sm:$0xff]
      %v253 = vld [vmem:[%s202 + $0x49] sm:$0xff]
      %v254 = vld [vmem:[%s202 + $0x51] sm:$0xff]
      %v255 = vld [vmem:[%s202 + $0x61] sm:$0xff]
      %v256 = vld [vmem:[%s202 + $0x69] sm:$0xff]
      %v257 = vld [vmem:[%s202 + $0x79] sm:$0xff]
      %v258 = vld [vmem:[%s202 + $0x81] sm:$0xff]
      %v259 = vld [vmem:[%s202 + $0x91] sm:$0xff]
      %v260 = vld [vmem:[%s202 + $0x99] sm:$0xff]
      %v261 = vld [vmem:[%s202 + $0xa9] sm:$0xff]
      %v262 = vld [vmem:[%s202 + $0xb1] sm:$0xff]
      %v263 = vld [vmem:[%s202 + $0xc1] sm:$0xff]
      %v264 = vld [vmem:[%s202 + $0xc9] sm:$0xff]
      %v265 = vld [vmem:[%s202 + $0xd9] sm:$0xff]
      %v266 = vld [vmem:[%s202 + $0xe1] sm:$0xff]
      %v267 = vld [vmem:[%s202 + $0xf1] sm:$0xff]
      %v268 = vld [vmem:[%s202 + $0xf9] sm:$0xff]
      %v269 = vld [vmem:[%s202 + $0x109] sm:$0xff]
      %v270 = vld [vmem:[%s202 + $0x111] sm:$0xff]
      %v271 = vld [vmem:[%s202 + $0x121] sm:$0xff]
      %v272 = vld [vmem:[%s202 + $0x129] sm:$0xff]
      %v273 = vld [vmem:[%s202 + $0x139] sm:$0xff]
      %v274 = vld [vmem:[%s202 + $0x141] sm:$0xff]
      %v275 = vld [vmem:[%s202 + $0x151] sm:$0xff]
      %v276 = vld [vmem:[%s202 + $0x159] sm:$0xff]
      %v277 = vld [vmem:[%s202 + $0x169] sm:$0xff]
      %v278 = vld [vmem:[%s202 + $0x171] sm:$0xff]
      %v279 = vld [vmem:[%s202 + $0x2] sm:$0xff]
      %v280 = vld [vmem:[%s202 + $0xa] sm:$0xff]
      %v281 = vld [vmem:[%s202 + $0x1a] sm:$0xff]
      %v282 = vld [vmem:[%s202 + $0x22] sm:$0xff]
      %v283 = vld [vmem:[%s202 + $0x32] sm:$0xff]
      %v284 = vld [vmem:[%s202 + $0x3a] sm:$0xff]
      %v285 = vld [vmem:[%s202 + $0x4a] sm:$0xff]
      %v286 = vld [vmem:[%s202 + $0x52] sm:$0xff]
      %v287 = vld [vmem:[%s202 + $0x62] sm:$0xff]
      %v288 = vld [vmem:[%s202 + $0x6a] sm:$0xff]
      %v289 = vld [vmem:[%s202 + $0x7a] sm:$0xff]
      %v290 = vld [vmem:[%s202 + $0x82] sm:$0xff]
      %v291 = vld [vmem:[%s202 + $0x92] sm:$0xff]
      %v292 = vld [vmem:[%s202 + $0x9a] sm:$0xff]
      %v293 = vld [vmem:[%s202 + $0xaa] sm:$0xff]
      %v294 = vld [vmem:[%s202 + $0xb2] sm:$0xff]
      %v295 = vld [vmem:[%s202 + $0xc2] sm:$0xff]
      %v296 = vld [vmem:[%s202 + $0xca] sm:$0xff]
      %v297 = vld [vmem:[%s202 + $0xda] sm:$0xff]
      %v298 = vld [vmem:[%s202 + $0xe2] sm:$0xff]
      %v299 = vld [vmem:[%s202 + $0xf2] sm:$0xff]
      %v300 = vld [vmem:[%s202 + $0xfa] sm:$0xff]
      %v301 = vld [vmem:[%s202 + $0x10a] sm:$0xff]
      %v302 = vld [vmem:[%s202 + $0x112] sm:$0xff]
      %v303 = vld [vmem:[%s202 + $0x122] sm:$0xff]
      %v304 = vld [vmem:[%s202 + $0x12a] sm:$0xff]
      %v305 = vld [vmem:[%s202 + $0x13a] sm:$0xff]
      %v306 = vld [vmem:[%s202 + $0x142] sm:$0xff]
      %v307 = vld [vmem:[%s202 + $0x152] sm:$0xff]
      %v308 = vld [vmem:[%s202 + $0x15a] sm:$0xff]
      %v309 = vld [vmem:[%s202 + $0x16a] sm:$0xff]
      %v310 = vld [vmem:[%s202 + $0x172] sm:$0xff]
      %s311 = scalar_lea.vmem %s202, 24
      %v312 = vld [vmem:[%s311] sm:$0xff]
      %v313 = vld [vmem:[%s311 + $0x8] sm:$0xff]
      %v314 = vld [vmem:[%s311 + $0x18] sm:$0xff]
      %v315 = vld [vmem:[%s311 + $0x20] sm:$0xff]
      %v316 = vld [vmem:[%s311 + $0x30] sm:$0xff]
      %v317 = vld [vmem:[%s311 + $0x38] sm:$0xff]
      %v318 = vld [vmem:[%s311 + $0x48] sm:$0xff]
      %v319 = vld [vmem:[%s311 + $0x50] sm:$0xff]
      %v320 = vld [vmem:[%s311 + $0x60] sm:$0xff]
      %v321 = vld [vmem:[%s311 + $0x68] sm:$0xff]
      %v322 = vld [vmem:[%s311 + $0x78] sm:$0xff]
      %v323 = vld [vmem:[%s311 + $0x80] sm:$0xff]
      %v324 = vld [vmem:[%s311 + $0x90] sm:$0xff]
      %v325 = vld [vmem:[%s311 + $0x98] sm:$0xff]
      %v326 = vld [vmem:[%s311 + $0xa8] sm:$0xff]
      %v327 = vld [vmem:[%s311 + $0xb0] sm:$0xff]
      %v328 = vld [vmem:[%s311 + $0xc0] sm:$0xff]
      %v329 = vld [vmem:[%s311 + $0xc8] sm:$0xff]
      %v330 = vld [vmem:[%s311 + $0xd8] sm:$0xff]
      %v331 = vld [vmem:[%s311 + $0xe0] sm:$0xff]
      %v332 = vld [vmem:[%s311 + $0xf0] sm:$0xff]
      %v333 = vld [vmem:[%s311 + $0xf8] sm:$0xff]
      %v334 = vld [vmem:[%s311 + $0x108] sm:$0xff]
      %v335 = vld [vmem:[%s311 + $0x110] sm:$0xff]
      %v336 = vld [vmem:[%s311 + $0x120] sm:$0xff]
      %v337 = vld [vmem:[%s311 + $0x128] sm:$0xff]
      %v338 = vld [vmem:[%s311 + $0x138] sm:$0xff]
      %v339 = vld [vmem:[%s311 + $0x140] sm:$0xff]
      %v340 = vld [vmem:[%s311 + $0x150] sm:$0xff]
      %v341 = vld [vmem:[%s311 + $0x158] sm:$0xff]
      %v342 = vld [vmem:[%s311 + $0x168] sm:$0xff]
      %v343 = vld [vmem:[%s311 + $0x170] sm:$0xff]
      %v344 = vld [vmem:[%s311 + $0x1] sm:$0xff]
      %v345 = vld [vmem:[%s311 + $0x9] sm:$0xff]
      %v346 = vld [vmem:[%s311 + $0x19] sm:$0xff]
      %v347 = vld [vmem:[%s311 + $0x21] sm:$0xff]
      %v348 = vld [vmem:[%s311 + $0x31] sm:$0xff]
      %v349 = vld [vmem:[%s311 + $0x39] sm:$0xff]
      %v350 = vld [vmem:[%s311 + $0x49] sm:$0xff]
      %v351 = vld [vmem:[%s311 + $0x51] sm:$0xff]
      %v352 = vld [vmem:[%s311 + $0x61] sm:$0xff]
      %v353 = vld [vmem:[%s311 + $0x69] sm:$0xff]
      %v354 = vld [vmem:[%s311 + $0x79] sm:$0xff]
      %v355 = vld [vmem:[%s311 + $0x81] sm:$0xff]
      %v356 = vld [vmem:[%s311 + $0x91] sm:$0xff]
      %v357 = vld [vmem:[%s311 + $0x99] sm:$0xff]
      %v358 = vld [vmem:[%s311 + $0xa9] sm:$0xff]
      %v359 = vld [vmem:[%s311 + $0xb1] sm:$0xff]
      %v360 = vld [vmem:[%s311 + $0xc1] sm:$0xff]
      %v361 = vld [vmem:[%s311 + $0xc9] sm:$0xff]
      %v362 = vld [vmem:[%s311 + $0xd9] sm:$0xff]
      %v363 = vld [vmem:[%s311 + $0xe1] sm:$0xff]
      %v364 = vld [vmem:[%s311 + $0xf1] sm:$0xff]
      %v365 = vld [vmem:[%s311 + $0xf9] sm:$0xff]
      %v366 = vld [vmem:[%s311 + $0x109] sm:$0xff]
      %v367 = vld [vmem:[%s311 + $0x111] sm:$0xff]
      %v368 = vld [vmem:[%s311 + $0x121] sm:$0xff]
      %v369 = vld [vmem:[%s311 + $0x129] sm:$0xff]
      %v370 = vld [vmem:[%s311 + $0x139] sm:$0xff]
      %v371 = vld [vmem:[%s311 + $0x141] sm:$0xff]
      %v372 = vld [vmem:[%s311 + $0x151] sm:$0xff]
      %v373 = vld [vmem:[%s311 + $0x159] sm:$0xff]
      %v374 = vld [vmem:[%s311 + $0x169] sm:$0xff]
      %v375 = vld [vmem:[%s311 + $0x171] sm:$0xff]
      %v376 = vld [vmem:[%s311 + $0x2] sm:$0xff]
      %v377 = vld [vmem:[%s311 + $0xa] sm:$0xff]
      %v378 = vld [vmem:[%s311 + $0x1a] sm:$0xff]
      %v379 = vld [vmem:[%s311 + $0x22] sm:$0xff]
      %v380 = vld [vmem:[%s311 + $0x32] sm:$0xff]
      %v381 = vld [vmem:[%s311 + $0x3a] sm:$0xff]
      %v382 = vld [vmem:[%s311 + $0x4a] sm:$0xff]
      %v383 = vld [vmem:[%s311 + $0x52] sm:$0xff]
      %v384 = vld [vmem:[%s311 + $0x62] sm:$0xff]
      %v385 = vld [vmem:[%s311 + $0x6a] sm:$0xff]
      %v386 = vld [vmem:[%s311 + $0x7a] sm:$0xff]
      %v387 = vld [vmem:[%s311 + $0x82] sm:$0xff]
      %v388 = vld [vmem:[%s311 + $0x92] sm:$0xff]
      %v389 = vld [vmem:[%s311 + $0x9a] sm:$0xff]
      %v390 = vld [vmem:[%s311 + $0xaa] sm:$0xff]
      %v391 = vld [vmem:[%s311 + $0xb2] sm:$0xff]
      %v392 = vld [vmem:[%s311 + $0xc2] sm:$0xff]
      %v393 = vld [vmem:[%s311 + $0xca] sm:$0xff]
      %v394 = vld [vmem:[%s311 + $0xda] sm:$0xff]
      %v395 = vld [vmem:[%s311 + $0xe2] sm:$0xff]
      %v396 = vld [vmem:[%s311 + $0xf2] sm:$0xff]
      %v397 = vld [vmem:[%s311 + $0xfa] sm:$0xff]
      %v398 = vld [vmem:[%s311 + $0x10a] sm:$0xff]
      %v399 = vld [vmem:[%s311 + $0x112] sm:$0xff]
      %v400 = vld [vmem:[%s311 + $0x122] sm:$0xff]
      %v401 = vld [vmem:[%s311 + $0x12a] sm:$0xff]
      %v402 = vld [vmem:[%s311 + $0x13a] sm:$0xff]
      %v403 = vld [vmem:[%s311 + $0x142] sm:$0xff]
      %v404 = vld [vmem:[%s311 + $0x152] sm:$0xff]
      %v405 = vld [vmem:[%s311 + $0x15a] sm:$0xff]
      %v406 = vld [vmem:[%s311 + $0x16a] sm:$0xff]
      %v407 = vld [vmem:[%s311 + $0x172] sm:$0xff]
      %s408 = scalar_lea.vmem %s202, 48
      %v409 = vld [vmem:[%s408] sm:$0xff]
      %v410 = vld [vmem:[%s408 + $0x8] sm:$0xff]
      %v411 = vld [vmem:[%s408 + $0x18] sm:$0xff]
      %v412 = vld [vmem:[%s408 + $0x20] sm:$0xff]
      %v413 = vld [vmem:[%s408 + $0x30] sm:$0xff]
      %v414 = vld [vmem:[%s408 + $0x38] sm:$0xff]
      %v415 = vld [vmem:[%s408 + $0x48] sm:$0xff]
      %v416 = vld [vmem:[%s408 + $0x50] sm:$0xff]
      %v417 = vld [vmem:[%s408 + $0x60] sm:$0xff]
      %v418 = vld [vmem:[%s408 + $0x68] sm:$0xff]
      %v419 = vld [vmem:[%s408 + $0x78] sm:$0xff]
      %v420 = vld [vmem:[%s408 + $0x80] sm:$0xff]
      %v421 = vld [vmem:[%s408 + $0x90] sm:$0xff]
      %v422 = vld [vmem:[%s408 + $0x98] sm:$0xff]
      %v423 = vld [vmem:[%s408 + $0xa8] sm:$0xff]
      %v424 = vld [vmem:[%s408 + $0xb0] sm:$0xff]
      %v425 = vld [vmem:[%s408 + $0xc0] sm:$0xff]
      %v426 = vld [vmem:[%s408 + $0xc8] sm:$0xff]
      %v427 = vld [vmem:[%s408 + $0xd8] sm:$0xff]
      %v428 = vld [vmem:[%s408 + $0xe0] sm:$0xff]
      %v429 = vld [vmem:[%s408 + $0xf0] sm:$0xff]
      %v430 = vld [vmem:[%s408 + $0xf8] sm:$0xff]
      %v431 = vld [vmem:[%s408 + $0x108] sm:$0xff]
      %v432 = vld [vmem:[%s408 + $0x110] sm:$0xff]
      %v433 = vld [vmem:[%s408 + $0x120] sm:$0xff]
      %v434 = vld [vmem:[%s408 + $0x128] sm:$0xff]
      %v435 = vld [vmem:[%s408 + $0x138] sm:$0xff]
      %v436 = vld [vmem:[%s408 + $0x140] sm:$0xff]
      %v437 = vld [vmem:[%s408 + $0x150] sm:$0xff]
      %v438 = vld [vmem:[%s408 + $0x158] sm:$0xff]
      %v439 = vld [vmem:[%s408 + $0x168] sm:$0xff]
      %v440 = vld [vmem:[%s408 + $0x170] sm:$0xff]
      %v441 = vld [vmem:[%s408 + $0x1] sm:$0xff]
      %v442 = vld [vmem:[%s408 + $0x9] sm:$0xff]
      %v443 = vld [vmem:[%s408 + $0x19] sm:$0xff]
      %v444 = vld [vmem:[%s408 + $0x21] sm:$0xff]
      %v445 = vld [vmem:[%s408 + $0x31] sm:$0xff]
      %v446 = vld [vmem:[%s408 + $0x39] sm:$0xff]
      %v447 = vld [vmem:[%s408 + $0x49] sm:$0xff]
      %v448 = vld [vmem:[%s408 + $0x51] sm:$0xff]
      %v449 = vld [vmem:[%s408 + $0x61] sm:$0xff]
      %v450 = vld [vmem:[%s408 + $0x69] sm:$0xff]
      %v451 = vld [vmem:[%s408 + $0x79] sm:$0xff]
      %v452 = vld [vmem:[%s408 + $0x81] sm:$0xff]
      %v453 = vld [vmem:[%s408 + $0x91] sm:$0xff]
      %v454 = vld [vmem:[%s408 + $0x99] sm:$0xff]
      %v455 = vld [vmem:[%s408 + $0xa9] sm:$0xff]
      %v456 = vld [vmem:[%s408 + $0xb1] sm:$0xff]
      %v457 = vld [vmem:[%s408 + $0xc1] sm:$0xff]
      %v458 = vld [vmem:[%s408 + $0xc9] sm:$0xff]
      %v459 = vld [vmem:[%s408 + $0xd9] sm:$0xff]
      %v460 = vld [vmem:[%s408 + $0xe1] sm:$0xff]
      %v461 = vld [vmem:[%s408 + $0xf1] sm:$0xff]
      %v462 = vld [vmem:[%s408 + $0xf9] sm:$0xff]
      %v463 = vld [vmem:[%s408 + $0x109] sm:$0xff]
      %v464 = vld [vmem:[%s408 + $0x111] sm:$0xff]
      %v465 = vld [vmem:[%s408 + $0x121] sm:$0xff]
      %v466 = vld [vmem:[%s408 + $0x129] sm:$0xff]
      %v467 = vld [vmem:[%s408 + $0x139] sm:$0xff]
      %v468 = vld [vmem:[%s408 + $0x141] sm:$0xff]
      %v469 = vld [vmem:[%s408 + $0x151] sm:$0xff]
      %v470 = vld [vmem:[%s408 + $0x159] sm:$0xff]
      %v471 = vld [vmem:[%s408 + $0x169] sm:$0xff]
      %v472 = vld [vmem:[%s408 + $0x171] sm:$0xff]
      %v473 = vld [vmem:[%s408 + $0x2] sm:$0xff]
      %v474 = vld [vmem:[%s408 + $0xa] sm:$0xff]
      %v475 = vld [vmem:[%s408 + $0x1a] sm:$0xff]
      %v476 = vld [vmem:[%s408 + $0x22] sm:$0xff]
      %v477 = vld [vmem:[%s408 + $0x32] sm:$0xff]
      %v478 = vld [vmem:[%s408 + $0x3a] sm:$0xff]
      %v479 = vld [vmem:[%s408 + $0x4a] sm:$0xff]
      %v480 = vld [vmem:[%s408 + $0x52] sm:$0xff]
      %v481 = vld [vmem:[%s408 + $0x62] sm:$0xff]
      %v482 = vld [vmem:[%s408 + $0x6a] sm:$0xff]
      %v483 = vld [vmem:[%s408 + $0x7a] sm:$0xff]
      %v484 = vld [vmem:[%s408 + $0x82] sm:$0xff]
      %v485 = vld [vmem:[%s408 + $0x92] sm:$0xff]
      %v486 = vld [vmem:[%s408 + $0x9a] sm:$0xff]
      %v487 = vld [vmem:[%s408 + $0xaa] sm:$0xff]
      %v488 = vld [vmem:[%s408 + $0xb2] sm:$0xff]
      %v489 = vld [vmem:[%s408 + $0xc2] sm:$0xff]
      %v490 = vld [vmem:[%s408 + $0xca] sm:$0xff]
      %v491 = vld [vmem:[%s408 + $0xda] sm:$0xff]
      %v492 = vld [vmem:[%s408 + $0xe2] sm:$0xff]
      %v493 = vld [vmem:[%s408 + $0xf2] sm:$0xff]
      %v494 = vld [vmem:[%s408 + $0xfa] sm:$0xff]
      %v495 = vld [vmem:[%s408 + $0x10a] sm:$0xff]
      %v496 = vld [vmem:[%s408 + $0x112] sm:$0xff]
      %v497 = vld [vmem:[%s408 + $0x122] sm:$0xff]
      %v498 = vld [vmem:[%s408 + $0x12a] sm:$0xff]
      %v499 = vld [vmem:[%s408 + $0x13a] sm:$0xff]
      %v500 = vld [vmem:[%s408 + $0x142] sm:$0xff]
      %v501 = vld [vmem:[%s408 + $0x152] sm:$0xff]
      %v502 = vld [vmem:[%s408 + $0x15a] sm:$0xff]
      %v503 = vld [vmem:[%s408 + $0x16a] sm:$0xff]
      %v504 = vld [vmem:[%s408 + $0x172] sm:$0xff]
      %537 = vrot.lane.b32.xlu0 %v247, 4
      %v538 = vpop.permute.xlu0 %537
      %539 = vrot.lane.b32.xlu0 %v248, 4
      %v540 = vpop.permute.xlu0 %539
      %541 = vrot.lane.b32.xlu0 %v249, 4
      %v542 = vpop.permute.xlu0 %541
      %543 = vrot.lane.b32.xlu0 %v250, 4
      %v544 = vpop.permute.xlu0 %543
      %545 = vrot.lane.b32.xlu0 %v251, 4
      %v546 = vpop.permute.xlu0 %545
      %547 = vrot.lane.b32.xlu0 %v252, 4
      %v548 = vpop.permute.xlu0 %547
      %549 = vrot.lane.b32.xlu0 %v253, 4
      %v550 = vpop.permute.xlu0 %549
      %551 = vrot.lane.b32.xlu0 %v254, 4
      %v552 = vpop.permute.xlu0 %551
      %553 = vrot.lane.b32.xlu0 %v255, 4
      %v554 = vpop.permute.xlu0 %553
      %555 = vrot.lane.b32.xlu0 %v256, 4
      %v556 = vpop.permute.xlu0 %555
      %557 = vrot.lane.b32.xlu0 %v257, 4
      %v558 = vpop.permute.xlu0 %557
      %559 = vrot.lane.b32.xlu0 %v258, 4
      %v560 = vpop.permute.xlu0 %559
      %561 = vrot.lane.b32.xlu0 %v259, 4
      %v562 = vpop.permute.xlu0 %561
      %563 = vrot.lane.b32.xlu0 %v260, 4
      %v564 = vpop.permute.xlu0 %563
      %565 = vrot.lane.b32.xlu0 %v261, 4
      %v566 = vpop.permute.xlu0 %565
      %567 = vrot.lane.b32.xlu0 %v262, 4
      %v568 = vpop.permute.xlu0 %567
      %569 = vrot.lane.b32.xlu0 %v263, 4
      %v570 = vpop.permute.xlu0 %569
      %571 = vrot.lane.b32.xlu0 %v264, 4
      %v572 = vpop.permute.xlu0 %571
      %573 = vrot.lane.b32.xlu0 %v265, 4
      %v574 = vpop.permute.xlu0 %573
      %575 = vrot.lane.b32.xlu0 %v266, 4
      %v576 = vpop.permute.xlu0 %575
      %577 = vrot.lane.b32.xlu0 %v267, 4
      %v578 = vpop.permute.xlu0 %577
      %579 = vrot.lane.b32.xlu0 %v268, 4
      %v580 = vpop.permute.xlu0 %579
      %581 = vrot.lane.b32.xlu0 %v269, 4
      %v582 = vpop.permute.xlu0 %581
      %583 = vrot.lane.b32.xlu0 %v270, 4
      %v584 = vpop.permute.xlu0 %583
      %585 = vrot.lane.b32.xlu0 %v271, 4
      %v586 = vpop.permute.xlu0 %585
      %587 = vrot.lane.b32.xlu0 %v272, 4
      %v588 = vpop.permute.xlu0 %587
      %589 = vrot.lane.b32.xlu0 %v273, 4
      %v590 = vpop.permute.xlu0 %589
      %591 = vrot.lane.b32.xlu0 %v274, 4
      %v592 = vpop.permute.xlu0 %591
      %593 = vrot.lane.b32.xlu0 %v275, 4
      %v594 = vpop.permute.xlu0 %593
      %595 = vrot.lane.b32.xlu0 %v276, 4
      %v596 = vpop.permute.xlu0 %595
      %597 = vrot.lane.b32.xlu0 %v277, 4
      %v598 = vpop.permute.xlu0 %597
      %599 = vrot.lane.b32.xlu0 %v278, 4
      %v600 = vpop.permute.xlu0 %599
      %665 = vrot.lane.b32.xlu0 %v279, 8
      %v666 = vpop.permute.xlu0 %665
      %667 = vrot.lane.b32.xlu0 %v280, 8
      %v668 = vpop.permute.xlu0 %667
      %669 = vrot.lane.b32.xlu0 %v281, 8
      %v670 = vpop.permute.xlu0 %669
      %671 = vrot.lane.b32.xlu0 %v282, 8
      %v672 = vpop.permute.xlu0 %671
      %673 = vrot.lane.b32.xlu0 %v283, 8
      %v674 = vpop.permute.xlu0 %673
      %675 = vrot.lane.b32.xlu0 %v284, 8
      %v676 = vpop.permute.xlu0 %675
      %677 = vrot.lane.b32.xlu0 %v285, 8
      %v678 = vpop.permute.xlu0 %677
      %679 = vrot.lane.b32.xlu0 %v286, 8
      %v680 = vpop.permute.xlu0 %679
      %681 = vrot.lane.b32.xlu0 %v287, 8
      %v682 = vpop.permute.xlu0 %681
      %683 = vrot.lane.b32.xlu0 %v288, 8
      %v684 = vpop.permute.xlu0 %683
      %685 = vrot.lane.b32.xlu0 %v289, 8
      %v686 = vpop.permute.xlu0 %685
      %687 = vrot.lane.b32.xlu0 %v290, 8
      %v688 = vpop.permute.xlu0 %687
      %689 = vrot.lane.b32.xlu0 %v291, 8
      %v690 = vpop.permute.xlu0 %689
      %691 = vrot.lane.b32.xlu0 %v292, 8
      %v692 = vpop.permute.xlu0 %691
      %693 = vrot.lane.b32.xlu0 %v293, 8
      %v694 = vpop.permute.xlu0 %693
      %695 = vrot.lane.b32.xlu0 %v294, 8
      %v696 = vpop.permute.xlu0 %695
      %697 = vrot.lane.b32.xlu0 %v295, 8
      %v698 = vpop.permute.xlu0 %697
      %699 = vrot.lane.b32.xlu0 %v296, 8
      %v700 = vpop.permute.xlu0 %699
      %701 = vrot.lane.b32.xlu0 %v297, 8
      %v702 = vpop.permute.xlu0 %701
      %703 = vrot.lane.b32.xlu0 %v298, 8
      %v704 = vpop.permute.xlu0 %703
      %705 = vrot.lane.b32.xlu0 %v299, 8
      %v706 = vpop.permute.xlu0 %705
      %707 = vrot.lane.b32.xlu0 %v300, 8
      %v708 = vpop.permute.xlu0 %707
      %709 = vrot.lane.b32.xlu0 %v301, 8
      %v710 = vpop.permute.xlu0 %709
      %711 = vrot.lane.b32.xlu0 %v302, 8
      %v712 = vpop.permute.xlu0 %711
      %713 = vrot.lane.b32.xlu0 %v303, 8
      %v714 = vpop.permute.xlu0 %713
      %715 = vrot.lane.b32.xlu0 %v304, 8
      %v716 = vpop.permute.xlu0 %715
      %717 = vrot.lane.b32.xlu0 %v305, 8
      %v718 = vpop.permute.xlu0 %717
      %719 = vrot.lane.b32.xlu0 %v306, 8
      %v720 = vpop.permute.xlu0 %719
      %721 = vrot.lane.b32.xlu0 %v307, 8
      %v722 = vpop.permute.xlu0 %721
      %723 = vrot.lane.b32.xlu0 %v308, 8
      %v724 = vpop.permute.xlu0 %723
      %725 = vrot.lane.b32.xlu0 %v309, 8
      %v726 = vpop.permute.xlu0 %725
      %727 = vrot.lane.b32.xlu0 %v310, 8
      %v728 = vpop.permute.xlu0 %727
      %793 = vrot.lane.b32.xlu0 %v312, 12
      %v794 = vpop.permute.xlu0 %793
      %795 = vrot.lane.b32.xlu0 %v313, 12
      %v796 = vpop.permute.xlu0 %795
      %797 = vrot.lane.b32.xlu0 %v314, 12
      %v798 = vpop.permute.xlu0 %797
      %799 = vrot.lane.b32.xlu0 %v315, 12
      %v800 = vpop.permute.xlu0 %799
      %801 = vrot.lane.b32.xlu0 %v316, 12
      %v802 = vpop.permute.xlu0 %801
      %803 = vrot.lane.b32.xlu0 %v317, 12
      %v804 = vpop.permute.xlu0 %803
      %805 = vrot.lane.b32.xlu0 %v318, 12
      %v806 = vpop.permute.xlu0 %805
      %807 = vrot.lane.b32.xlu0 %v319, 12
      %v808 = vpop.permute.xlu0 %807
      %809 = vrot.lane.b32.xlu0 %v320, 12
      %v810 = vpop.permute.xlu0 %809
      %811 = vrot.lane.b32.xlu0 %v321, 12
      %v812 = vpop.permute.xlu0 %811
      %813 = vrot.lane.b32.xlu0 %v322, 12
      %v814 = vpop.permute.xlu0 %813
      %815 = vrot.lane.b32.xlu0 %v323, 12
      %v816 = vpop.permute.xlu0 %815
      %817 = vrot.lane.b32.xlu0 %v324, 12
      %v818 = vpop.permute.xlu0 %817
      %819 = vrot.lane.b32.xlu0 %v325, 12
      %v820 = vpop.permute.xlu0 %819
      %821 = vrot.lane.b32.xlu0 %v326, 12
      %v822 = vpop.permute.xlu0 %821
      %823 = vrot.lane.b32.xlu0 %v327, 12
      %v824 = vpop.permute.xlu0 %823
      %825 = vrot.lane.b32.xlu0 %v328, 12
      %v826 = vpop.permute.xlu0 %825
      %827 = vrot.lane.b32.xlu0 %v329, 12
      %v828 = vpop.permute.xlu0 %827
      %829 = vrot.lane.b32.xlu0 %v330, 12
      %v830 = vpop.permute.xlu0 %829
      %831 = vrot.lane.b32.xlu0 %v331, 12
      %v832 = vpop.permute.xlu0 %831
      %833 = vrot.lane.b32.xlu0 %v332, 12
      %v834 = vpop.permute.xlu0 %833
      %835 = vrot.lane.b32.xlu0 %v333, 12
      %v836 = vpop.permute.xlu0 %835
      %837 = vrot.lane.b32.xlu0 %v334, 12
      %v838 = vpop.permute.xlu0 %837
      %839 = vrot.lane.b32.xlu0 %v335, 12
      %v840 = vpop.permute.xlu0 %839
      %841 = vrot.lane.b32.xlu0 %v336, 12
      %v842 = vpop.permute.xlu0 %841
      %843 = vrot.lane.b32.xlu0 %v337, 12
      %v844 = vpop.permute.xlu0 %843
      %845 = vrot.lane.b32.xlu0 %v338, 12
      %v846 = vpop.permute.xlu0 %845
      %847 = vrot.lane.b32.xlu0 %v339, 12
      %v848 = vpop.permute.xlu0 %847
      %849 = vrot.lane.b32.xlu0 %v340, 12
      %v850 = vpop.permute.xlu0 %849
      %851 = vrot.lane.b32.xlu0 %v341, 12
      %v852 = vpop.permute.xlu0 %851
      %853 = vrot.lane.b32.xlu0 %v342, 12
      %v854 = vpop.permute.xlu0 %853
      %855 = vrot.lane.b32.xlu0 %v343, 12
      %v856 = vpop.permute.xlu0 %855
      %921 = vrot.lane.b32.xlu0 %v344, 16
      %v922 = vpop.permute.xlu0 %921
      %923 = vrot.lane.b32.xlu0 %v345, 16
      %v924 = vpop.permute.xlu0 %923
      %925 = vrot.lane.b32.xlu0 %v346, 16
      %v926 = vpop.permute.xlu0 %925
      %927 = vrot.lane.b32.xlu0 %v347, 16
      %v928 = vpop.permute.xlu0 %927
      %929 = vrot.lane.b32.xlu0 %v348, 16
      %v930 = vpop.permute.xlu0 %929
      %931 = vrot.lane.b32.xlu0 %v349, 16
      %v932 = vpop.permute.xlu0 %931
      %933 = vrot.lane.b32.xlu0 %v350, 16
      %v934 = vpop.permute.xlu0 %933
      %935 = vrot.lane.b32.xlu0 %v351, 16
      %v936 = vpop.permute.xlu0 %935
      %937 = vrot.lane.b32.xlu0 %v352, 16
      %v938 = vpop.permute.xlu0 %937
      %939 = vrot.lane.b32.xlu0 %v353, 16
      %v940 = vpop.permute.xlu0 %939
      %941 = vrot.lane.b32.xlu0 %v354, 16
      %v942 = vpop.permute.xlu0 %941
      %943 = vrot.lane.b32.xlu0 %v355, 16
      %v944 = vpop.permute.xlu0 %943
      %945 = vrot.lane.b32.xlu0 %v356, 16
      %v946 = vpop.permute.xlu0 %945
      %947 = vrot.lane.b32.xlu0 %v357, 16
      %v948 = vpop.permute.xlu0 %947
      %949 = vrot.lane.b32.xlu0 %v358, 16
      %v950 = vpop.permute.xlu0 %949
      %951 = vrot.lane.b32.xlu0 %v359, 16
      %v952 = vpop.permute.xlu0 %951
      %953 = vrot.lane.b32.xlu0 %v360, 16
      %v954 = vpop.permute.xlu0 %953
      %955 = vrot.lane.b32.xlu0 %v361, 16
      %v956 = vpop.permute.xlu0 %955
      %957 = vrot.lane.b32.xlu0 %v362, 16
      %v958 = vpop.permute.xlu0 %957
      %959 = vrot.lane.b32.xlu0 %v363, 16
      %v960 = vpop.permute.xlu0 %959
      %961 = vrot.lane.b32.xlu0 %v364, 16
      %v962 = vpop.permute.xlu0 %961
      %963 = vrot.lane.b32.xlu0 %v365, 16
      %v964 = vpop.permute.xlu0 %963
      %965 = vrot.lane.b32.xlu0 %v366, 16
      %v966 = vpop.permute.xlu0 %965
      %967 = vrot.lane.b32.xlu0 %v367, 16
      %v968 = vpop.permute.xlu0 %967
      %969 = vrot.lane.b32.xlu0 %v368, 16
      %v970 = vpop.permute.xlu0 %969
      %971 = vrot.lane.b32.xlu0 %v369, 16
      %v972 = vpop.permute.xlu0 %971
      %973 = vrot.lane.b32.xlu0 %v370, 16
      %v974 = vpop.permute.xlu0 %973
      %975 = vrot.lane.b32.xlu0 %v371, 16
      %v976 = vpop.permute.xlu0 %975
      %977 = vrot.lane.b32.xlu0 %v372, 16
      %v978 = vpop.permute.xlu0 %977
      %979 = vrot.lane.b32.xlu0 %v373, 16
      %v980 = vpop.permute.xlu0 %979
      %981 = vrot.lane.b32.xlu0 %v374, 16
      %v982 = vpop.permute.xlu0 %981
      %983 = vrot.lane.b32.xlu0 %v375, 16
      %v984 = vpop.permute.xlu0 %983
      %1049 = vrot.lane.b32.xlu0 %v376, 20
      %v1050 = vpop.permute.xlu0 %1049
      %1051 = vrot.lane.b32.xlu0 %v377, 20
      %v1052 = vpop.permute.xlu0 %1051
      %1053 = vrot.lane.b32.xlu0 %v378, 20
      %v1054 = vpop.permute.xlu0 %1053
      %1055 = vrot.lane.b32.xlu0 %v379, 20
      %v1056 = vpop.permute.xlu0 %1055
      %1057 = vrot.lane.b32.xlu0 %v380, 20
      %v1058 = vpop.permute.xlu0 %1057
      %1059 = vrot.lane.b32.xlu0 %v381, 20
      %v1060 = vpop.permute.xlu0 %1059
      %1061 = vrot.lane.b32.xlu0 %v382, 20
      %v1062 = vpop.permute.xlu0 %1061
      %1063 = vrot.lane.b32.xlu0 %v383, 20
      %v1064 = vpop.permute.xlu0 %1063
      %1065 = vrot.lane.b32.xlu0 %v384, 20
      %v1066 = vpop.permute.xlu0 %1065
      %1067 = vrot.lane.b32.xlu0 %v385, 20
      %v1068 = vpop.permute.xlu0 %1067
      %1069 = vrot.lane.b32.xlu0 %v386, 20
      %v1070 = vpop.permute.xlu0 %1069
      %1071 = vrot.lane.b32.xlu0 %v387, 20
      %v1072 = vpop.permute.xlu0 %1071
      %1073 = vrot.lane.b32.xlu0 %v388, 20
      %v1074 = vpop.permute.xlu0 %1073
      %1075 = vrot.lane.b32.xlu0 %v389, 20
      %v1076 = vpop.permute.xlu0 %1075
      %1077 = vrot.lane.b32.xlu0 %v390, 20
      %v1078 = vpop.permute.xlu0 %1077
      %1079 = vrot.lane.b32.xlu0 %v391, 20
      %v1080 = vpop.permute.xlu0 %1079
      %1081 = vrot.lane.b32.xlu0 %v392, 20
      %v1082 = vpop.permute.xlu0 %1081
      %1083 = vrot.lane.b32.xlu0 %v393, 20
      %v1084 = vpop.permute.xlu0 %1083
      %1085 = vrot.lane.b32.xlu0 %v394, 20
      %v1086 = vpop.permute.xlu0 %1085
      %1087 = vrot.lane.b32.xlu0 %v395, 20
      %v1088 = vpop.permute.xlu0 %1087
      %1089 = vrot.lane.b32.xlu0 %v396, 20
      %v1090 = vpop.permute.xlu0 %1089
      %1091 = vrot.lane.b32.xlu0 %v397, 20
      %v1092 = vpop.permute.xlu0 %1091
      %1093 = vrot.lane.b32.xlu0 %v398, 20
      %v1094 = vpop.permute.xlu0 %1093
      %1095 = vrot.lane.b32.xlu0 %v399, 20
      %v1096 = vpop.permute.xlu0 %1095
      %1097 = vrot.lane.b32.xlu0 %v400, 20
      %v1098 = vpop.permute.xlu0 %1097
      %1099 = vrot.lane.b32.xlu0 %v401, 20
      %v1100 = vpop.permute.xlu0 %1099
      %1101 = vrot.lane.b32.xlu0 %v402, 20
      %v1102 = vpop.permute.xlu0 %1101
      %1103 = vrot.lane.b32.xlu0 %v403, 20
      %v1104 = vpop.permute.xlu0 %1103
      %1105 = vrot.lane.b32.xlu0 %v404, 20
      %v1106 = vpop.permute.xlu0 %1105
      %1107 = vrot.lane.b32.xlu0 %v405, 20
      %v1108 = vpop.permute.xlu0 %1107
      %1109 = vrot.lane.b32.xlu0 %v406, 20
      %v1110 = vpop.permute.xlu0 %1109
      %1111 = vrot.lane.b32.xlu0 %v407, 20
      %v1112 = vpop.permute.xlu0 %1111
      %1177 = vrot.lane.b32.xlu0 %v409, 24
      %v1178 = vpop.permute.xlu0 %1177
      %1179 = vrot.lane.b32.xlu0 %v410, 24
      %v1180 = vpop.permute.xlu0 %1179
      %1181 = vrot.lane.b32.xlu0 %v411, 24
      %v1182 = vpop.permute.xlu0 %1181
      %1183 = vrot.lane.b32.xlu0 %v412, 24
      %v1184 = vpop.permute.xlu0 %1183
      %1185 = vrot.lane.b32.xlu0 %v413, 24
      %v1186 = vpop.permute.xlu0 %1185
      %1187 = vrot.lane.b32.xlu0 %v414, 24
      %v1188 = vpop.permute.xlu0 %1187
      %1189 = vrot.lane.b32.xlu0 %v415, 24
      %v1190 = vpop.permute.xlu0 %1189
      %1191 = vrot.lane.b32.xlu0 %v416, 24
      %v1192 = vpop.permute.xlu0 %1191
      %1193 = vrot.lane.b32.xlu0 %v417, 24
      %v1194 = vpop.permute.xlu0 %1193
      %1195 = vrot.lane.b32.xlu0 %v418, 24
      %v1196 = vpop.permute.xlu0 %1195
      %1197 = vrot.lane.b32.xlu0 %v419, 24
      %v1198 = vpop.permute.xlu0 %1197
      %1199 = vrot.lane.b32.xlu0 %v420, 24
      %v1200 = vpop.permute.xlu0 %1199
      %1201 = vrot.lane.b32.xlu0 %v421, 24
      %v1202 = vpop.permute.xlu0 %1201
      %1203 = vrot.lane.b32.xlu0 %v422, 24
      %v1204 = vpop.permute.xlu0 %1203
      %1205 = vrot.lane.b32.xlu0 %v423, 24
      %v1206 = vpop.permute.xlu0 %1205
      %1207 = vrot.lane.b32.xlu0 %v424, 24
      %v1208 = vpop.permute.xlu0 %1207
      %1209 = vrot.lane.b32.xlu0 %v425, 24
      %v1210 = vpop.permute.xlu0 %1209
      %1211 = vrot.lane.b32.xlu0 %v426, 24
      %v1212 = vpop.permute.xlu0 %1211
      %1213 = vrot.lane.b32.xlu0 %v427, 24
      %v1214 = vpop.permute.xlu0 %1213
      %1215 = vrot.lane.b32.xlu0 %v428, 24
      %v1216 = vpop.permute.xlu0 %1215
      %1217 = vrot.lane.b32.xlu0 %v429, 24
      %v1218 = vpop.permute.xlu0 %1217
      %1219 = vrot.lane.b32.xlu0 %v430, 24
      %v1220 = vpop.permute.xlu0 %1219
      %1221 = vrot.lane.b32.xlu0 %v431, 24
      %v1222 = vpop.permute.xlu0 %1221
      %1223 = vrot.lane.b32.xlu0 %v432, 24
      %v1224 = vpop.permute.xlu0 %1223
      %1225 = vrot.lane.b32.xlu0 %v433, 24
      %v1226 = vpop.permute.xlu0 %1225
      %1227 = vrot.lane.b32.xlu0 %v434, 24
      %v1228 = vpop.permute.xlu0 %1227
      %1229 = vrot.lane.b32.xlu0 %v435, 24
      %v1230 = vpop.permute.xlu0 %1229
      %1231 = vrot.lane.b32.xlu0 %v436, 24
      %v1232 = vpop.permute.xlu0 %1231
      %1233 = vrot.lane.b32.xlu0 %v437, 24
      %v1234 = vpop.permute.xlu0 %1233
      %1235 = vrot.lane.b32.xlu0 %v438, 24
      %v1236 = vpop.permute.xlu0 %1235
      %1237 = vrot.lane.b32.xlu0 %v439, 24
      %v1238 = vpop.permute.xlu0 %1237
      %1239 = vrot.lane.b32.xlu0 %v440, 24
      %v1240 = vpop.permute.xlu0 %1239
      %1305 = vrot.lane.b32.xlu0 %v441, 28
      %v1306 = vpop.permute.xlu0 %1305
      %1307 = vrot.lane.b32.xlu0 %v442, 28
      %v1308 = vpop.permute.xlu0 %1307
      %1309 = vrot.lane.b32.xlu0 %v443, 28
      %v1310 = vpop.permute.xlu0 %1309
      %1311 = vrot.lane.b32.xlu0 %v444, 28
      %v1312 = vpop.permute.xlu0 %1311
      %1313 = vrot.lane.b32.xlu0 %v445, 28
      %v1314 = vpop.permute.xlu0 %1313
      %1315 = vrot.lane.b32.xlu0 %v446, 28
      %v1316 = vpop.permute.xlu0 %1315
      %1317 = vrot.lane.b32.xlu0 %v447, 28
      %v1318 = vpop.permute.xlu0 %1317
      %1319 = vrot.lane.b32.xlu0 %v448, 28
      %v1320 = vpop.permute.xlu0 %1319
      %1321 = vrot.lane.b32.xlu0 %v449, 28
      %v1322 = vpop.permute.xlu0 %1321
      %1323 = vrot.lane.b32.xlu0 %v450, 28
      %v1324 = vpop.permute.xlu0 %1323
      %1325 = vrot.lane.b32.xlu0 %v451, 28
      %v1326 = vpop.permute.xlu0 %1325
      %1327 = vrot.lane.b32.xlu0 %v452, 28
      %v1328 = vpop.permute.xlu0 %1327
      %1329 = vrot.lane.b32.xlu0 %v453, 28
      %v1330 = vpop.permute.xlu0 %1329
      %1331 = vrot.lane.b32.xlu0 %v454, 28
      %v1332 = vpop.permute.xlu0 %1331
      %1333 = vrot.lane.b32.xlu0 %v455, 28
      %v1334 = vpop.permute.xlu0 %1333
      %1335 = vrot.lane.b32.xlu0 %v456, 28
      %v1336 = vpop.permute.xlu0 %1335
      %1337 = vrot.lane.b32.xlu0 %v457, 28
      %v1338 = vpop.permute.xlu0 %1337
      %1339 = vrot.lane.b32.xlu0 %v458, 28
      %v1340 = vpop.permute.xlu0 %1339
      %1341 = vrot.lane.b32.xlu0 %v459, 28
      %v1342 = vpop.permute.xlu0 %1341
      %1343 = vrot.lane.b32.xlu0 %v460, 28
      %v1344 = vpop.permute.xlu0 %1343
      %1345 = vrot.lane.b32.xlu0 %v461, 28
      %v1346 = vpop.permute.xlu0 %1345
      %1347 = vrot.lane.b32.xlu0 %v462, 28
      %v1348 = vpop.permute.xlu0 %1347
      %1349 = vrot.lane.b32.xlu0 %v463, 28
      %v1350 = vpop.permute.xlu0 %1349
      %1351 = vrot.lane.b32.xlu0 %v464, 28
      %v1352 = vpop.permute.xlu0 %1351
      %1353 = vrot.lane.b32.xlu0 %v465, 28
      %v1354 = vpop.permute.xlu0 %1353
      %1355 = vrot.lane.b32.xlu0 %v466, 28
      %v1356 = vpop.permute.xlu0 %1355
      %1357 = vrot.lane.b32.xlu0 %v467, 28
      %v1358 = vpop.permute.xlu0 %1357
      %1359 = vrot.lane.b32.xlu0 %v468, 28
      %v1360 = vpop.permute.xlu0 %1359
      %1361 = vrot.lane.b32.xlu0 %v469, 28
      %v1362 = vpop.permute.xlu0 %1361
      %1363 = vrot.lane.b32.xlu0 %v470, 28
      %v1364 = vpop.permute.xlu0 %1363
      %1365 = vrot.lane.b32.xlu0 %v471, 28
      %v1366 = vpop.permute.xlu0 %1365
      %1367 = vrot.lane.b32.xlu0 %v472, 28
      %v1368 = vpop.permute.xlu0 %1367
      %1433 = vrot.lane.b32.xlu0 %v473, 32
      %v1434 = vpop.permute.xlu0 %1433
      %1435 = vrot.lane.b32.xlu0 %v474, 32
      %v1436 = vpop.permute.xlu0 %1435
      %1437 = vrot.lane.b32.xlu0 %v475, 32
      %v1438 = vpop.permute.xlu0 %1437
      %1439 = vrot.lane.b32.xlu0 %v476, 32
      %v1440 = vpop.permute.xlu0 %1439
      %1441 = vrot.lane.b32.xlu0 %v477, 32
      %v1442 = vpop.permute.xlu0 %1441
      %1443 = vrot.lane.b32.xlu0 %v478, 32
      %v1444 = vpop.permute.xlu0 %1443
      %1445 = vrot.lane.b32.xlu0 %v479, 32
      %v1446 = vpop.permute.xlu0 %1445
      %1447 = vrot.lane.b32.xlu0 %v480, 32
      %v1448 = vpop.permute.xlu0 %1447
      %1449 = vrot.lane.b32.xlu0 %v481, 32
      %v1450 = vpop.permute.xlu0 %1449
      %1451 = vrot.lane.b32.xlu0 %v482, 32
      %v1452 = vpop.permute.xlu0 %1451
      %1453 = vrot.lane.b32.xlu0 %v483, 32
      %v1454 = vpop.permute.xlu0 %1453
      %1455 = vrot.lane.b32.xlu0 %v484, 32
      %v1456 = vpop.permute.xlu0 %1455
      %1457 = vrot.lane.b32.xlu0 %v485, 32
      %v1458 = vpop.permute.xlu0 %1457
      %1459 = vrot.lane.b32.xlu0 %v486, 32
      %v1460 = vpop.permute.xlu0 %1459
      %1461 = vrot.lane.b32.xlu0 %v487, 32
      %v1462 = vpop.permute.xlu0 %1461
      %1463 = vrot.lane.b32.xlu0 %v488, 32
      %v1464 = vpop.permute.xlu0 %1463
      %1465 = vrot.lane.b32.xlu0 %v489, 32
      %v1466 = vpop.permute.xlu0 %1465
      %1467 = vrot.lane.b32.xlu0 %v490, 32
      %v1468 = vpop.permute.xlu0 %1467
      %1469 = vrot.lane.b32.xlu0 %v491, 32
      %v1470 = vpop.permute.xlu0 %1469
      %1471 = vrot.lane.b32.xlu0 %v492, 32
      %v1472 = vpop.permute.xlu0 %1471
      %1473 = vrot.lane.b32.xlu0 %v493, 32
      %v1474 = vpop.permute.xlu0 %1473
      %1475 = vrot.lane.b32.xlu0 %v494, 32
      %v1476 = vpop.permute.xlu0 %1475
      %1477 = vrot.lane.b32.xlu0 %v495, 32
      %v1478 = vpop.permute.xlu0 %1477
      %1479 = vrot.lane.b32.xlu0 %v496, 32
      %v1480 = vpop.permute.xlu0 %1479
      %1481 = vrot.lane.b32.xlu0 %v497, 32
      %v1482 = vpop.permute.xlu0 %1481
      %1483 = vrot.lane.b32.xlu0 %v498, 32
      %v1484 = vpop.permute.xlu0 %1483
      %1485 = vrot.lane.b32.xlu0 %v499, 32
      %v1486 = vpop.permute.xlu0 %1485
      %1487 = vrot.lane.b32.xlu0 %v500, 32
      %v1488 = vpop.permute.xlu0 %1487
      %1489 = vrot.lane.b32.xlu0 %v501, 32
      %v1490 = vpop.permute.xlu0 %1489
      %1491 = vrot.lane.b32.xlu0 %v502, 32
      %v1492 = vpop.permute.xlu0 %1491
      %1493 = vrot.lane.b32.xlu0 %v503, 32
      %v1494 = vpop.permute.xlu0 %1493
      %1495 = vrot.lane.b32.xlu0 %v504, 32
      %v1496 = vpop.permute.xlu0 %1495
      %vm1529 = vcmask 31744
      %v1530 = vsel %vm1529, %v215, %v538
      %v1531 = vsel %vm1529, %v216, %v540
      %v1532 = vsel %vm1529, %v217, %v542
      %v1533 = vsel %vm1529, %v218, %v544
      %v1534 = vsel %vm1529, %v219, %v546
      %v1535 = vsel %vm1529, %v220, %v548
      %v1536 = vsel %vm1529, %v221, %v550
      %v1537 = vsel %vm1529, %v222, %v552
      %v1538 = vsel %vm1529, %v223, %v554
      %v1539 = vsel %vm1529, %v224, %v556
      %v1540 = vsel %vm1529, %v225, %v558
      %v1541 = vsel %vm1529, %v226, %v560
      %v1542 = vsel %vm1529, %v227, %v562
      %v1543 = vsel %vm1529, %v228, %v564
      %v1544 = vsel %vm1529, %v229, %v566
      %v1545 = vsel %vm1529, %v230, %v568
      %v1546 = vsel %vm1529, %v231, %v570
      %v1547 = vsel %vm1529, %v232, %v572
      %v1548 = vsel %vm1529, %v233, %v574
      %v1549 = vsel %vm1529, %v234, %v576
      %v1550 = vsel %vm1529, %v235, %v578
      %v1551 = vsel %vm1529, %v236, %v580
      %v1552 = vsel %vm1529, %v237, %v582
      %v1553 = vsel %vm1529, %v238, %v584
      %v1554 = vsel %vm1529, %v239, %v586
      %v1555 = vsel %vm1529, %v240, %v588
      %v1556 = vsel %vm1529, %v241, %v590
      %v1557 = vsel %vm1529, %v242, %v592
      %v1558 = vsel %vm1529, %v243, %v594
      %v1559 = vsel %vm1529, %v244, %v596
      %v1560 = vsel %vm1529, %v245, %v598
      %v1561 = vsel %vm1529, %v246, %v600
      %vm1562 = vcmask 64512
      %v1563 = vsel %vm1562, %v1530, %v666
      %v1564 = vsel %vm1562, %v1531, %v668
      %v1565 = vsel %vm1562, %v1532, %v670
      %v1566 = vsel %vm1562, %v1533, %v672
      %v1567 = vsel %vm1562, %v1534, %v674
      %v1568 = vsel %vm1562, %v1535, %v676
      %v1569 = vsel %vm1562, %v1536, %v678
      %v1570 = vsel %vm1562, %v1537, %v680
      %v1571 = vsel %vm1562, %v1538, %v682
      %v1572 = vsel %vm1562, %v1539, %v684
      %v1573 = vsel %vm1562, %v1540, %v686
      %v1574 = vsel %vm1562, %v1541, %v688
      %v1575 = vsel %vm1562, %v1542, %v690
      %v1576 = vsel %vm1562, %v1543, %v692
      %v1577 = vsel %vm1562, %v1544, %v694
      %v1578 = vsel %vm1562, %v1545, %v696
      %v1579 = vsel %vm1562, %v1546, %v698
      %v1580 = vsel %vm1562, %v1547, %v700
      %v1581 = vsel %vm1562, %v1548, %v702
      %v1582 = vsel %vm1562, %v1549, %v704
      %v1583 = vsel %vm1562, %v1550, %v706
      %v1584 = vsel %vm1562, %v1551, %v708
      %v1585 = vsel %vm1562, %v1552, %v710
      %v1586 = vsel %vm1562, %v1553, %v712
      %v1587 = vsel %vm1562, %v1554, %v714
      %v1588 = vsel %vm1562, %v1555, %v716
      %v1589 = vsel %vm1562, %v1556, %v718
      %v1590 = vsel %vm1562, %v1557, %v720
      %v1591 = vsel %vm1562, %v1558, %v722
      %v1592 = vsel %vm1562, %v1559, %v724
      %v1593 = vsel %vm1562, %v1560, %v726
      %v1594 = vsel %vm1562, %v1561, %v728
      %vm1595 = vcmask 97280
      %v1596 = vsel %vm1595, %v1563, %v794
      %v1597 = vsel %vm1595, %v1564, %v796
      %v1598 = vsel %vm1595, %v1565, %v798
      %v1599 = vsel %vm1595, %v1566, %v800
      %v1600 = vsel %vm1595, %v1567, %v802
      %v1601 = vsel %vm1595, %v1568, %v804
      %v1602 = vsel %vm1595, %v1569, %v806
      %v1603 = vsel %vm1595, %v1570, %v808
      %v1604 = vsel %vm1595, %v1571, %v810
      %v1605 = vsel %vm1595, %v1572, %v812
      %v1606 = vsel %vm1595, %v1573, %v814
      %v1607 = vsel %vm1595, %v1574, %v816
      %v1608 = vsel %vm1595, %v1575, %v818
      %v1609 = vsel %vm1595, %v1576, %v820
      %v1610 = vsel %vm1595, %v1577, %v822
      %v1611 = vsel %vm1595, %v1578, %v824
      %v1612 = vsel %vm1595, %v1579, %v826
      %v1613 = vsel %vm1595, %v1580, %v828
      %v1614 = vsel %vm1595, %v1581, %v830
      %v1615 = vsel %vm1595, %v1582, %v832
      %v1616 = vsel %vm1595, %v1583, %v834
      %v1617 = vsel %vm1595, %v1584, %v836
      %v1618 = vsel %vm1595, %v1585, %v838
      %v1619 = vsel %vm1595, %v1586, %v840
      %v1620 = vsel %vm1595, %v1587, %v842
      %v1621 = vsel %vm1595, %v1588, %v844
      %v1622 = vsel %vm1595, %v1589, %v846
      %v1623 = vsel %vm1595, %v1590, %v848
      %v1624 = vsel %vm1595, %v1591, %v850
      %v1625 = vsel %vm1595, %v1592, %v852
      %v1626 = vsel %vm1595, %v1593, %v854
      %v1627 = vsel %vm1595, %v1594, %v856
      %vm1628 = vcmask 130048
      %v1629 = vsel %vm1628, %v1596, %v922
      %v1630 = vsel %vm1628, %v1597, %v924
      %v1631 = vsel %vm1628, %v1598, %v926
      %v1632 = vsel %vm1628, %v1599, %v928
      %v1633 = vsel %vm1628, %v1600, %v930
      %v1634 = vsel %vm1628, %v1601, %v932
      %v1635 = vsel %vm1628, %v1602, %v934
      %v1636 = vsel %vm1628, %v1603, %v936
      %v1637 = vsel %vm1628, %v1604, %v938
      %v1638 = vsel %vm1628, %v1605, %v940
      %v1639 = vsel %vm1628, %v1606, %v942
      %v1640 = vsel %vm1628, %v1607, %v944
      %v1641 = vsel %vm1628, %v1608, %v946
      %v1642 = vsel %vm1628, %v1609, %v948
      %v1643 = vsel %vm1628, %v1610, %v950
      %v1644 = vsel %vm1628, %v1611, %v952
      %v1645 = vsel %vm1628, %v1612, %v954
      %v1646 = vsel %vm1628, %v1613, %v956
      %v1647 = vsel %vm1628, %v1614, %v958
      %v1648 = vsel %vm1628, %v1615, %v960
      %v1649 = vsel %vm1628, %v1616, %v962
      %v1650 = vsel %vm1628, %v1617, %v964
      %v1651 = vsel %vm1628, %v1618, %v966
      %v1652 = vsel %vm1628, %v1619, %v968
      %v1653 = vsel %vm1628, %v1620, %v970
      %v1654 = vsel %vm1628, %v1621, %v972
      %v1655 = vsel %vm1628, %v1622, %v974
      %v1656 = vsel %vm1628, %v1623, %v976
      %v1657 = vsel %vm1628, %v1624, %v978
      %v1658 = vsel %vm1628, %v1625, %v980
      %v1659 = vsel %vm1628, %v1626, %v982
      %v1660 = vsel %vm1628, %v1627, %v984
      %vm1661 = vcmask 162816
      %v1662 = vsel %vm1661, %v1629, %v1050
      %v1663 = vsel %vm1661, %v1630, %v1052
      %v1664 = vsel %vm1661, %v1631, %v1054
      %v1665 = vsel %vm1661, %v1632, %v1056
      %v1666 = vsel %vm1661, %v1633, %v1058
      %v1667 = vsel %vm1661, %v1634, %v1060
      %v1668 = vsel %vm1661, %v1635, %v1062
      %v1669 = vsel %vm1661, %v1636, %v1064
      %v1670 = vsel %vm1661, %v1637, %v1066
      %v1671 = vsel %vm1661, %v1638, %v1068
      %v1672 = vsel %vm1661, %v1639, %v1070
      %v1673 = vsel %vm1661, %v1640, %v1072
      %v1674 = vsel %vm1661, %v1641, %v1074
      %v1675 = vsel %vm1661, %v1642, %v1076
      %v1676 = vsel %vm1661, %v1643, %v1078
      %v1677 = vsel %vm1661, %v1644, %v1080
      %v1678 = vsel %vm1661, %v1645, %v1082
      %v1679 = vsel %vm1661, %v1646, %v1084
      %v1680 = vsel %vm1661, %v1647, %v1086
      %v1681 = vsel %vm1661, %v1648, %v1088
      %v1682 = vsel %vm1661, %v1649, %v1090
      %v1683 = vsel %vm1661, %v1650, %v1092
      %v1684 = vsel %vm1661, %v1651, %v1094
      %v1685 = vsel %vm1661, %v1652, %v1096
      %v1686 = vsel %vm1661, %v1653, %v1098
      %v1687 = vsel %vm1661, %v1654, %v1100
      %v1688 = vsel %vm1661, %v1655, %v1102
      %v1689 = vsel %vm1661, %v1656, %v1104
      %v1690 = vsel %vm1661, %v1657, %v1106
      %v1691 = vsel %vm1661, %v1658, %v1108
      %v1692 = vsel %vm1661, %v1659, %v1110
      %v1693 = vsel %vm1661, %v1660, %v1112
      %vm1694 = vcmask 195584
      %v1695 = vsel %vm1694, %v1662, %v1178
      %v1696 = vsel %vm1694, %v1663, %v1180
      %v1697 = vsel %vm1694, %v1664, %v1182
      %v1698 = vsel %vm1694, %v1665, %v1184
      %v1699 = vsel %vm1694, %v1666, %v1186
      %v1700 = vsel %vm1694, %v1667, %v1188
      %v1701 = vsel %vm1694, %v1668, %v1190
      %v1702 = vsel %vm1694, %v1669, %v1192
      %v1703 = vsel %vm1694, %v1670, %v1194
      %v1704 = vsel %vm1694, %v1671, %v1196
      %v1705 = vsel %vm1694, %v1672, %v1198
      %v1706 = vsel %vm1694, %v1673, %v1200
      %v1707 = vsel %vm1694, %v1674, %v1202
      %v1708 = vsel %vm1694, %v1675, %v1204
      %v1709 = vsel %vm1694, %v1676, %v1206
      %v1710 = vsel %vm1694, %v1677, %v1208
      %v1711 = vsel %vm1694, %v1678, %v1210
      %v1712 = vsel %vm1694, %v1679, %v1212
      %v1713 = vsel %vm1694, %v1680, %v1214
      %v1714 = vsel %vm1694, %v1681, %v1216
      %v1715 = vsel %vm1694, %v1682, %v1218
      %v1716 = vsel %vm1694, %v1683, %v1220
      %v1717 = vsel %vm1694, %v1684, %v1222
      %v1718 = vsel %vm1694, %v1685, %v1224
      %v1719 = vsel %vm1694, %v1686, %v1226
      %v1720 = vsel %vm1694, %v1687, %v1228
      %v1721 = vsel %vm1694, %v1688, %v1230
      %v1722 = vsel %vm1694, %v1689, %v1232
      %v1723 = vsel %vm1694, %v1690, %v1234
      %v1724 = vsel %vm1694, %v1691, %v1236
      %v1725 = vsel %vm1694, %v1692, %v1238
      %v1726 = vsel %vm1694, %v1693, %v1240
      %vm1727 = vcmask 228352
      %v1728 = vsel %vm1727, %v1695, %v1306
      %v1729 = vsel %vm1727, %v1696, %v1308
      %v1730 = vsel %vm1727, %v1697, %v1310
      %v1731 = vsel %vm1727, %v1698, %v1312
      %v1732 = vsel %vm1727, %v1699, %v1314
      %v1733 = vsel %vm1727, %v1700, %v1316
      %v1734 = vsel %vm1727, %v1701, %v1318
      %v1735 = vsel %vm1727, %v1702, %v1320
      %v1736 = vsel %vm1727, %v1703, %v1322
      %v1737 = vsel %vm1727, %v1704, %v1324
      %v1738 = vsel %vm1727, %v1705, %v1326
      %v1739 = vsel %vm1727, %v1706, %v1328
      %v1740 = vsel %vm1727, %v1707, %v1330
      %v1741 = vsel %vm1727, %v1708, %v1332
      %v1742 = vsel %vm1727, %v1709, %v1334
      %v1743 = vsel %vm1727, %v1710, %v1336
      %v1744 = vsel %vm1727, %v1711, %v1338
      %v1745 = vsel %vm1727, %v1712, %v1340
      %v1746 = vsel %vm1727, %v1713, %v1342
      %v1747 = vsel %vm1727, %v1714, %v1344
      %v1748 = vsel %vm1727, %v1715, %v1346
      %v1749 = vsel %vm1727, %v1716, %v1348
      %v1750 = vsel %vm1727, %v1717, %v1350
      %v1751 = vsel %vm1727, %v1718, %v1352
      %v1752 = vsel %vm1727, %v1719, %v1354
      %v1753 = vsel %vm1727, %v1720, %v1356
      %v1754 = vsel %vm1727, %v1721, %v1358
      %v1755 = vsel %vm1727, %v1722, %v1360
      %v1756 = vsel %vm1727, %v1723, %v1362
      %v1757 = vsel %vm1727, %v1724, %v1364
      %v1758 = vsel %vm1727, %v1725, %v1366
      %v1759 = vsel %vm1727, %v1726, %v1368
      %vm1760 = vcmask 261120
      %v1761 = vsel %vm1760, %v1728, %v1434
      %v1762 = vsel %vm1760, %v1729, %v1436
      %v1763 = vsel %vm1760, %v1730, %v1438
      %v1764 = vsel %vm1760, %v1731, %v1440
      %v1765 = vsel %vm1760, %v1732, %v1442
      %v1766 = vsel %vm1760, %v1733, %v1444
      %v1767 = vsel %vm1760, %v1734, %v1446
      %v1768 = vsel %vm1760, %v1735, %v1448
      %v1769 = vsel %vm1760, %v1736, %v1450
      %v1770 = vsel %vm1760, %v1737, %v1452
      %v1771 = vsel %vm1760, %v1738, %v1454
      %v1772 = vsel %vm1760, %v1739, %v1456
      %v1773 = vsel %vm1760, %v1740, %v1458
      %v1774 = vsel %vm1760, %v1741, %v1460
      %v1775 = vsel %vm1760, %v1742, %v1462
      %v1776 = vsel %vm1760, %v1743, %v1464
      %v1777 = vsel %vm1760, %v1744, %v1466
      %v1778 = vsel %vm1760, %v1745, %v1468
      %v1779 = vsel %vm1760, %v1746, %v1470
      %v1780 = vsel %vm1760, %v1747, %v1472
      %v1781 = vsel %vm1760, %v1748, %v1474
      %v1782 = vsel %vm1760, %v1749, %v1476
      %v1783 = vsel %vm1760, %v1750, %v1478
      %v1784 = vsel %vm1760, %v1751, %v1480
      %v1785 = vsel %vm1760, %v1752, %v1482
      %v1786 = vsel %vm1760, %v1753, %v1484
      %v1787 = vsel %vm1760, %v1754, %v1486
      %v1788 = vsel %vm1760, %v1755, %v1488
      %v1789 = vsel %vm1760, %v1756, %v1490
      %v1790 = vsel %vm1760, %v1757, %v1492
      %v1791 = vsel %vm1760, %v1758, %v1494
      %v1792 = vsel %vm1760, %v1759, %v1496
      %v1793 = vld [vmem:[%s1] sm:$0xff]
      %v1794 = vld [vmem:[%s1 + $0x8] sm:$0xff]
      %v1795 = vld [vmem:[%s1 + $0x10] sm:$0xff]
      %v1796 = vld [vmem:[%s1 + $0x18] sm:$0xff]
      %v1797 = vld [vmem:[%s1 + $0x20] sm:$0xf]
      %v1798 = vld [vmem:[%s2] sm:$0x1]
      %v1800 = vlaneseq
      %v1801 = vshrl.u32 %v1800, 7
      %v1802 = vsub.s32 0, %v1801
      %v1803 = vrot.slane %v1798, %v1802
      %vm1805 = vcmask 293888
      %v1807 = vsel %vm1805, %v1761, 0
      %v1810 = vsel %vm1805, %v1762, 0
      %v1813 = vsel %vm1805, %v1763, 0
      %v1816 = vsel %vm1805, %v1764, 0
      %v1819 = vsel %vm1805, %v1765, 0
      %v1822 = vsel %vm1805, %v1766, 0
      %v1825 = vsel %vm1805, %v1767, 0
      %v1828 = vsel %vm1805, %v1768, 0
      %v1831 = vsel %vm1805, %v1769, 0
      %v1834 = vsel %vm1805, %v1770, 0
      %v1837 = vsel %vm1805, %v1771, 0
      %v1840 = vsel %vm1805, %v1772, 0
      %v1843 = vsel %vm1805, %v1773, 0
      %v1846 = vsel %vm1805, %v1774, 0
      %v1849 = vsel %vm1805, %v1775, 0
      %v1852 = vsel %vm1805, %v1776, 0
      %v1855 = vsel %vm1805, %v1777, 0
      %v1858 = vsel %vm1805, %v1778, 0
      %v1861 = vsel %vm1805, %v1779, 0
      %v1864 = vsel %vm1805, %v1780, 0
      %v1867 = vsel %vm1805, %v1781, 0
      %v1870 = vsel %vm1805, %v1782, 0
      %v1873 = vsel %vm1805, %v1783, 0
      %v1876 = vsel %vm1805, %v1784, 0
      %v1879 = vsel %vm1805, %v1785, 0
      %v1882 = vsel %vm1805, %v1786, 0
      %v1885 = vsel %vm1805, %v1787, 0
      %v1888 = vsel %vm1805, %v1788, 0
      %v1891 = vsel %vm1805, %v1789, 0
      %v1894 = vsel %vm1805, %v1790, 0
      %v1897 = vsel %vm1805, %v1791, 0
      %v1900 = vsel %vm1805, %v1792, 0
      %vm1902 = vcmask 1043456
      %v1904 = vsel %vm1902, %v1797, 0
      %1906 = vmatprep.subr.mxu0 0.0
      %1907 = vmatpush1.msra.mxu0 %v1793
      %1908 = vmatprep.subr.mxu0 0.0
      %1909 = vmatpush1.msra.mxu0 %v1794
      %1910 = vmatprep.subr.mxu0 0.0
      %1911 = vmatpush1.msra.mxu0 %v1795
      %1912 = vmatprep.subr.mxu0 0.0
      %1913 = vmatpush1.msra.mxu0 %v1796
      %1914 = vmatprep.subr.mxu0 0.0
      %1915 = vmatpush1.msra.mxu0 %v1904
      %1916 = vmatprep.subr.mxu0 0.0
      %1917 = vmatpush1.msra.mxu0 0.0
      %1918 = vmatprep.subr.mxu0 0.0
      %1919 = vmatpush1.msra.mxu0 0.0
      %1920 = vmatprep.subr.mxu0 0.0
      %1921 = vmatpush1.msra.mxu0 0.0
      %1922 = vmatprep.subr.mxu0 0.0
      %1923 = vmatpush1.msra.mxu0 0.0
      %1924 = vmatprep.subr.mxu0 0.0
      %1925 = vmatpush1.msra.mxu0 0.0
      %1926 = vmatprep.subr.mxu0 0.0
      %1927 = vmatpush1.msra.mxu0 0.0
      %1928 = vmatprep.subr.mxu0 0.0
      %1929 = vmatpush1.msra.mxu0 0.0
      %1930 = vmatprep.subr.mxu0 0.0
      %1931 = vmatpush1.msra.mxu0 0.0
      %1932 = vmatprep.subr.mxu0 0.0
      %1933 = vmatpush1.msra.mxu0 0.0
      %1934 = vmatprep.subr.mxu0 0.0
      %1935 = vmatpush1.msra.mxu0 0.0
      %1936 = vmatprep.subr.mxu0 0.0
      %1937 = vmatpush1.msra.mxu0 0.0
      %1938 = vmatprep.subr.mxu0 0.0
      %1939 = vmatpush1.msra.mxu0 0.0
      %1940 = vmatprep.subr.mxu0 0.0
      %1941 = vmatpush1.msra.mxu0 0.0
      %1942 = vmatprep.subr.mxu0 0.0
      %1943 = vmatpush1.msra.mxu0 0.0
      %1944 = vmatprep.subr.mxu0 0.0
      %1945 = vmatpush1.msra.mxu0 0.0
      %1946 = vmatprep.subr.mxu0 0.0
      %1947 = vmatpush1.msra.mxu0 0.0
      %1948 = vmatprep.subr.mxu0 0.0
      %1949 = vmatpush1.msra.mxu0 0.0
      %1950 = vmatprep.subr.mxu0 0.0
      %1951 = vmatpush1.msra.mxu0 0.0
      %1952 = vmatprep.subr.mxu0 0.0
      %1953 = vmatpush1.msra.mxu0 0.0
      %1954 = vmatprep.subr.mxu0 0.0
      %1955 = vmatpush1.msra.mxu0 0.0
      %1956 = vmatprep.subr.mxu0 0.0
      %1957 = vmatpush1.msra.mxu0 0.0
      %1958 = vmatprep.subr.mxu0 0.0
      %1959 = vmatpush1.msra.mxu0 0.0
      %1960 = vmatprep.subr.mxu0 0.0
      %1961 = vmatpush1.msra.mxu0 0.0
      %1962 = vmatprep.subr.mxu0 0.0
      %1963 = vmatpush1.msra.mxu0 0.0
      %1964 = vmatprep.subr.mxu0 0.0
      %1965 = vmatpush1.msra.mxu0 0.0
      %1966 = vmatprep.subr.mxu0 0.0
      %1967 = vmatpush1.msra.mxu0 0.0
      %1968 = vmatprep.subr.mxu0 0.0
      %1969 = vmatpush1.msra.mxu0 0.0
      %1970 = vmatprep.mubr.f32.mxu0 0.0
      %1971 = vmatmul.mubr.f32.gmra.mrb[0].mxu0 %v1807
      %v1972 = vpop.f32.mrb[0].mxu0
      %v1973 = vadd.f32 %v1803, %v1972
      %v1974 = vpop.f32.mrb[0].mxu0
      %1975 = vmatprep.mubr.f32.mxu0 0.0
      %1976 = vmatmul.mubr.f32.gmra.mrb[0].mxu0 %v1810
      %v1977 = vpop.f32.mrb[0].mxu0
      %v1978 = vadd.f32 %v1803, %v1977
      %v1979 = vpop.f32.mrb[0].mxu0
      %1980 = vmatprep.mubr.f32.mxu0 0.0
      %1981 = vmatmul.mubr.f32.gmra.mrb[0].mxu0 %v1813
      %v1982 = vpop.f32.mrb[0].mxu0
      %v1983 = vadd.f32 %v1803, %v1982
      %v1984 = vpop.f32.mrb[0].mxu0
      %1985 = vmatprep.mubr.f32.mxu0 0.0
      %1986 = vmatmul.mubr.f32.gmra.mrb[0].mxu0 %v1816
      %v1987 = vpop.f32.mrb[0].mxu0
      %v1988 = vadd.f32 %v1803, %v1987
      %v1989 = vpop.f32.mrb[0].mxu0
      %1990 = vmatprep.mubr.f32.mxu0 0.0
      %1991 = vmatmul.mubr.f32.gmra.mrb[0].mxu0 %v1819
      %v1992 = vpop.f32.mrb[0].mxu0
      %v1993 = vadd.f32 %v1803, %v1992
      %v1994 = vpop.f32.mrb[0].mxu0
      %1995 = vmatprep.mubr.f32.mxu0 0.0
      %1996 = vmatmul.mubr.f32.gmra.mrb[0].mxu0 %v1822
      %v1997 = vpop.f32.mrb[0].mxu0
      %v1998 = vadd.f32 %v1803, %v1997
      %v1999 = vpop.f32.mrb[0].mxu0
      %2000 = vmatprep.mubr.f32.mxu0 0.0
      %2001 = vmatmul.mubr.f32.gmra.mrb[0].mxu0 %v1825
      %v2002 = vpop.f32.mrb[0].mxu0
      %v2003 = vadd.f32 %v1803, %v2002
      %v2004 = vpop.f32.mrb[0].mxu0
      %2005 = vmatprep.mubr.f32.mxu0 0.0
      %2006 = vmatmul.mubr.f32.gmra.mrb[0].mxu0 %v1828
      %v2007 = vpop.f32.mrb[0].mxu0
      %v2008 = vadd.f32 %v1803, %v2007
      %v2009 = vpop.f32.mrb[0].mxu0
      %2010 = vmatprep.mubr.f32.mxu0 0.0
      %2011 = vmatmul.mubr.f32.gmra.mrb[0].mxu0 %v1831
      %v2012 = vpop.f32.mrb[0].mxu0
      %v2013 = vadd.f32 %v1803, %v2012
      %v2014 = vpop.f32.mrb[0].mxu0
      %2015 = vmatprep.mubr.f32.mxu0 0.0
      %2016 = vmatmul.mubr.f32.gmra.mrb[0].mxu0 %v1834
      %v2017 = vpop.f32.mrb[0].mxu0
      %v2018 = vadd.f32 %v1803, %v2017
      %v2019 = vpop.f32.mrb[0].mxu0
      %2020 = vmatprep.mubr.f32.mxu0 0.0
      %2021 = vmatmul.mubr.f32.gmra.mrb[0].mxu0 %v1837
      %v2022 = vpop.f32.mrb[0].mxu0
      %v2023 = vadd.f32 %v1803, %v2022
      %v2024 = vpop.f32.mrb[0].mxu0
      %2025 = vmatprep.mubr.f32.mxu0 0.0
      %2026 = vmatmul.mubr.f32.gmra.mrb[0].mxu0 %v1840
      %v2027 = vpop.f32.mrb[0].mxu0
      %v2028 = vadd.f32 %v1803, %v2027
      %v2029 = vpop.f32.mrb[0].mxu0
      %2030 = vmatprep.mubr.f32.mxu0 0.0
      %2031 = vmatmul.mubr.f32.gmra.mrb[0].mxu0 %v1843
      %v2032 = vpop.f32.mrb[0].mxu0
      %v2033 = vadd.f32 %v1803, %v2032
      %v2034 = vpop.f32.mrb[0].mxu0
      %2035 = vmatprep.mubr.f32.mxu0 0.0
      %2036 = vmatmul.mubr.f32.gmra.mrb[0].mxu0 %v1846
      %v2037 = vpop.f32.mrb[0].mxu0
      %v2038 = vadd.f32 %v1803, %v2037
      %v2039 = vpop.f32.mrb[0].mxu0
      %2040 = vmatprep.mubr.f32.mxu0 0.0
      %2041 = vmatmul.mubr.f32.gmra.mrb[0].mxu0 %v1849
      %v2042 = vpop.f32.mrb[0].mxu0
      %v2043 = vadd.f32 %v1803, %v2042
      %v2044 = vpop.f32.mrb[0].mxu0
      %2045 = vmatprep.mubr.f32.mxu0 0.0
      %2046 = vmatmul.mubr.f32.gmra.mrb[0].mxu0 %v1852
      %v2047 = vpop.f32.mrb[0].mxu0
      %v2048 = vadd.f32 %v1803, %v2047
      %v2049 = vpop.f32.mrb[0].mxu0
      %2050 = vmatprep.mubr.f32.mxu0 0.0
      %2051 = vmatmul.mubr.f32.gmra.mrb[0].mxu0 %v1855
      %v2052 = vpop.f32.mrb[0].mxu0
      %v2053 = vadd.f32 %v1803, %v2052
      %v2054 = vpop.f32.mrb[0].mxu0
      %2055 = vmatprep.mubr.f32.mxu0 0.0
      %2056 = vmatmul.mubr.f32.gmra.mrb[0].mxu0 %v1858
      %v2057 = vpop.f32.mrb[0].mxu0
      %v2058 = vadd.f32 %v1803, %v2057
      %v2059 = vpop.f32.mrb[0].mxu0
      %2060 = vmatprep.mubr.f32.mxu0 0.0
      %2061 = vmatmul.mubr.f32.gmra.mrb[0].mxu0 %v1861
      %v2062 = vpop.f32.mrb[0].mxu0
      %v2063 = vadd.f32 %v1803, %v2062
      %v2064 = vpop.f32.mrb[0].mxu0
      %2065 = vmatprep.mubr.f32.mxu0 0.0
      %2066 = vmatmul.mubr.f32.gmra.mrb[0].mxu0 %v1864
      %v2067 = vpop.f32.mrb[0].mxu0
      %v2068 = vadd.f32 %v1803, %v2067
      %v2069 = vpop.f32.mrb[0].mxu0
      %2070 = vmatprep.mubr.f32.mxu0 0.0
      %2071 = vmatmul.mubr.f32.gmra.mrb[0].mxu0 %v1867
      %v2072 = vpop.f32.mrb[0].mxu0
      %v2073 = vadd.f32 %v1803, %v2072
      %v2074 = vpop.f32.mrb[0].mxu0
      %2075 = vmatprep.mubr.f32.mxu0 0.0
      %2076 = vmatmul.mubr.f32.gmra.mrb[0].mxu0 %v1870
      %v2077 = vpop.f32.mrb[0].mxu0
      %v2078 = vadd.f32 %v1803, %v2077
      %v2079 = vpop.f32.mrb[0].mxu0
      %2080 = vmatprep.mubr.f32.mxu0 0.0
      %2081 = vmatmul.mubr.f32.gmra.mrb[0].mxu0 %v1873
      %v2082 = vpop.f32.mrb[0].mxu0
      %v2083 = vadd.f32 %v1803, %v2082
      %v2084 = vpop.f32.mrb[0].mxu0
      %2085 = vmatprep.mubr.f32.mxu0 0.0
      %2086 = vmatmul.mubr.f32.gmra.mrb[0].mxu0 %v1876
      %v2087 = vpop.f32.mrb[0].mxu0
      %v2088 = vadd.f32 %v1803, %v2087
      %v2089 = vpop.f32.mrb[0].mxu0
      %2090 = vmatprep.mubr.f32.mxu0 0.0
      %2091 = vmatmul.mubr.f32.gmra.mrb[0].mxu0 %v1879
      %v2092 = vpop.f32.mrb[0].mxu0
      %v2093 = vadd.f32 %v1803, %v2092
      %v2094 = vpop.f32.mrb[0].mxu0
      %2095 = vmatprep.mubr.f32.mxu0 0.0
      %2096 = vmatmul.mubr.f32.gmra.mrb[0].mxu0 %v1882
      %v2097 = vpop.f32.mrb[0].mxu0
      %v2098 = vadd.f32 %v1803, %v2097
      %v2099 = vpop.f32.mrb[0].mxu0
      %2100 = vmatprep.mubr.f32.mxu0 0.0
      %2101 = vmatmul.mubr.f32.gmra.mrb[0].mxu0 %v1885
      %v2102 = vpop.f32.mrb[0].mxu0
      %v2103 = vadd.f32 %v1803, %v2102
      %v2104 = vpop.f32.mrb[0].mxu0
      %2105 = vmatprep.mubr.f32.mxu0 0.0
      %2106 = vmatmul.mubr.f32.gmra.mrb[0].mxu0 %v1888
      %v2107 = vpop.f32.mrb[0].mxu0
      %v2108 = vadd.f32 %v1803, %v2107
      %v2109 = vpop.f32.mrb[0].mxu0
      %2110 = vmatprep.mubr.f32.mxu0 0.0
      %2111 = vmatmul.mubr.f32.gmra.mrb[0].mxu0 %v1891
      %v2112 = vpop.f32.mrb[0].mxu0
      %v2113 = vadd.f32 %v1803, %v2112
      %v2114 = vpop.f32.mrb[0].mxu0
      %2115 = vmatprep.mubr.f32.mxu0 0.0
      %2116 = vmatmul.mubr.f32.gmra.mrb[0].mxu0 %v1894
      %v2117 = vpop.f32.mrb[0].mxu0
      %v2118 = vadd.f32 %v1803, %v2117
      %v2119 = vpop.f32.mrb[0].mxu0
      %2120 = vmatprep.mubr.f32.mxu0 0.0
      %2121 = vmatmul.mubr.f32.gmra.mrb[0].mxu0 %v1897
      %v2122 = vpop.f32.mrb[0].mxu0
      %v2123 = vadd.f32 %v1803, %v2122
      %v2124 = vpop.f32.mrb[0].mxu0
      %2125 = vmatprep.mubr.f32.mxu0 0.0
      %2126 = vmatmul.mubr.f32.gmra.mrb[0].mxu0 %v1900
      %v2127 = vpop.f32.mrb[0].mxu0
      %v2128 = vadd.f32 %v1803, %v2127
      %v2129 = vpop.f32.mrb[0].mxu0
      %2130 = vdwg.mxu0
      %2131 = vst [vmem:[%s213] sm:$0xff] %v1973
      %2132 = vst [vmem:[%s213 + $0x8] sm:$0xff] %v1978
      %2133 = vst [vmem:[%s213 + $0x10] sm:$0xff] %v1983
      %2134 = vst [vmem:[%s213 + $0x18] sm:$0xff] %v1988
      %2135 = vst [vmem:[%s213 + $0x20] sm:$0xff] %v1993
      %2136 = vst [vmem:[%s213 + $0x28] sm:$0xff] %v1998
      %2137 = vst [vmem:[%s213 + $0x30] sm:$0xff] %v2003
      %2138 = vst [vmem:[%s213 + $0x38] sm:$0xff] %v2008
      %2139 = vst [vmem:[%s213 + $0x40] sm:$0xff] %v2013
      %2140 = vst [vmem:[%s213 + $0x48] sm:$0xff] %v2018
      %2141 = vst [vmem:[%s213 + $0x50] sm:$0xff] %v2023
      %2142 = vst [vmem:[%s213 + $0x58] sm:$0xff] %v2028
      %2143 = vst [vmem:[%s213 + $0x60] sm:$0xff] %v2033
      %2144 = vst [vmem:[%s213 + $0x68] sm:$0xff] %v2038
      %2145 = vst [vmem:[%s213 + $0x70] sm:$0xff] %v2043
      %2146 = vst [vmem:[%s213 + $0x78] sm:$0xff] %v2048
      %2147 = vst [vmem:[%s213 + $0x80] sm:$0xff] %v2053
      %2148 = vst [vmem:[%s213 + $0x88] sm:$0xff] %v2058
      %2149 = vst [vmem:[%s213 + $0x90] sm:$0xff] %v2063
      %2150 = vst [vmem:[%s213 + $0x98] sm:$0xff] %v2068
      %2151 = vst [vmem:[%s213 + $0xa0] sm:$0xff] %v2073
      %2152 = vst [vmem:[%s213 + $0xa8] sm:$0xff] %v2078
      %2153 = vst [vmem:[%s213 + $0xb0] sm:$0xff] %v2083
      %2154 = vst [vmem:[%s213 + $0xb8] sm:$0xff] %v2088
      %2155 = vst [vmem:[%s213 + $0xc0] sm:$0xff] %v2093
      %2156 = vst [vmem:[%s213 + $0xc8] sm:$0xff] %v2098
      %2157 = vst [vmem:[%s213 + $0xd0] sm:$0xff] %v2103
      %2158 = vst [vmem:[%s213 + $0xd8] sm:$0xff] %v2108
      %2159 = vst [vmem:[%s213 + $0xe0] sm:$0xff] %v2113
      %2160 = vst [vmem:[%s213 + $0xe8] sm:$0xff] %v2118
      %2161 = vst [vmem:[%s213 + $0xf0] sm:$0xff] %v2123
      %2162 = vst [vmem:[%s213 + $0xf8] sm:$0xff] %v2128
      %s2163 = smul.u32 16, %s19
      %p2164 = scmp.lt.s32.totalorder %s18, 1
      %s2165 = scalar_select %p2164, %s18, 1
      %p2166 = scmp.lt.s32.totalorder %s2163, 15
      %s2167 = scalar_select %p2166, %s2163, 15
      %s2168 = smul.addr %s2167, 2
      %s2169 = smul.addr %s2165, 32
      %s2170 = sadd.s32 %s2168, %s2169
      %s2171 = smul.addr %s2170, 8
      %s2172 = scalar_lea.vmem %s3, %s2171
      // Predicated region
      $region33: #{skip_connection_forward.1} parent=31 // pred_check
        %p2173 = pneg %p116
      $region34: #{skip_connection_forward.1} parent=31 // pred_check_branch
        %2175 = sbr.rel (%p2173) target = $region36
      $region35: #{skip_connection_forward.1} parent=31 // pred_region
        %s2176 = smul.u32 16, %s19
      $region36: #{skip_connection_forward.1} parent=31 // pred_fallthru
        _
    $region32: #{skip_connection_forward.1} parent=5 // pred_fallthru
      _
    %p2177 = scmp.le.s32.totalorder 2, %s9
    // Predicated region
    $region37: #{skip_connection_forward.1} parent=5 // pred_check
      %p2178 = pneg %p2177
    $region38: #{skip_connection_forward.1} parent=5 // pred_check_branch
      %2180 = sbr.rel (%p2178) target = $region40
    $region39: #{skip_connection_forward.1} parent=5 // pred_region
      %s2181 = ssub.s32 %s9, 2
      // Predicated region
      $region41: #{skip_connection_forward.1} parent=39 // pred_check
        %p2182 = pneg %p122
      $region42: #{skip_connection_forward.1} parent=39 // pred_check_branch
        %2184 = sbr.rel (%p2182) target = $region44
      $region43: #{skip_connection_forward.1} parent=39 // pred_region
        %s2185 = smul.u32 16, %s21
        %p2186 = scmp.lt.s32.totalorder %s20, 1
        %s2187 = scalar_select %p2186, %s20, 1
        %p2188 = scmp.lt.s32.totalorder %s2185, 15
        %s2189 = scalar_select %p2188, %s2185, 15
        %s2190 = smul.addr %s2189, 2
        %s2191 = smul.addr %s2187, 32
        %s2192 = sadd.s32 %s2190, %s2191
        %s2193 = smul.addr %s2192, 8
        %s2194 = scalar_lea.vmem %s3, %s2193
      $region44: #{skip_connection_forward.1} parent=39 // pred_fallthru
        _
    $region40: #{skip_connection_forward.1} parent=5 // pred_fallthru
      _
  $region6: #{skip_connection_forward.1} parent=0 // loop_footer
    %s13 = sadd.s32 1, %s9
  $region7: #{skip_connection_forward.1} parent=0 // loop_footer_branch
    %8 = sbr.rel target = $region3
  $region8: #{skip_connection_forward.1} parent=0 // loop_exit
    _

</llo_original>
